<compile_context>
chip_gen: v7x
topology: tpu7x:2x2x1
jax: 0.10.0
libtpu: 0.0.40
codegen_flags: <defaults>
</compile_context>

<pallas_src>
import jax
import jax.numpy as jnp
from jax.experimental import pallas as pl
from jax.experimental.pallas import tpu as pltpu


# ----------------------------- fused model kernel -----------------------------
def _make_rnn_kernel(n_layers, T, Bp, H, V):
    """Fused Embedding -> bidirectional LSTM stack -> Linear kernel.

    Combined gate/column layout (8H wide, gate-major / direction-minor),
    gate order i, f, o, g (sigmoid gates contiguous):
        [ i_f i_b | f_f f_b | o_f o_b | g_f g_b ]
    Combined state layout (2H wide): [ h_fwd | h_bwd ], [ c_fwd | c_bwd ].
    """
    H2 = 2 * H
    TB = T * Bp

    def kernel(lengths_ref, tok_ref, emb_ref, *rest):
        w_refs = rest[:3 * n_layers]            # per layer: wih_fb_t, whh_bd, bias_fb
        fc_w_ref = rest[3 * n_layers]           # [2H, OUT_PAD] f32
        fc_b_ref = rest[3 * n_layers + 1]       # [1, OUT_PAD]  f32
        out_ref = rest[3 * n_layers + 2]        # [Bp, OUT_PAD] f32 (lane-dense)

        lengths = lengths_ref[...]              # [Bp, 1] int32

        # ---- hoisted constants: lane selectors + per-step length masks ------
        lane2h = jax.lax.broadcasted_iota(jnp.int32, (Bp, H2), 1)   # 0..2H-1
        is_bwd = lane2h >= H                                         # [Bp, 2H]
        use_bwd_cols = jnp.tile(lane2h, (1, 4)) >= H                 # [Bp, 8H]
        step_mask = []
        for t in range(T):
            pos = jnp.where(is_bwd, T - 1 - t, t)                    # [Bp, 2H]
            step_mask.append(pos < lengths)                          # [Bp, 2H] bool

        # ---- fused embedding lookup: one-hot @ table on the MXU -------------
        # TODO(synk): for large vocabularies replace the one-hot matmul with a
        #             DMA row gather; at vocab=50 this is a single tiny matmul.
        tok = tok_ref[...]                                           # [T*Bp, 1]
        vocab_iota = jax.lax.broadcasted_iota(jnp.int32, (TB, V), 1)
        onehot = (vocab_iota == tok).astype(jnp.bfloat16)
        seq_bf = jnp.dot(onehot, emb_ref[...].astype(jnp.bfloat16),
                         preferred_element_type=jnp.float32
                         ).astype(jnp.bfloat16)                      # [T*Bp, E]

        h = jnp.zeros((Bp, H2), jnp.float32)
        for l in range(n_layers):
            wih_ref, whh_ref, bias_ref = w_refs[3 * l:3 * l + 3]

            # ---- input projection, hoisted out of the recurrence ------------
            # one [T*Bp, IN] x [IN, 8H] bf16 MXU matmul (bias folded in, f32 acc)
            gx = (jnp.dot(seq_bf, wih_ref[...],
                          preferred_element_type=jnp.float32)
                  + bias_ref[...])                                   # [T*Bp, 8H] f32
            whh_bf = whh_ref[...]                                    # [2H, 8H] bf16

            # ---- fused bidirectional recurrence (fully unrolled, T small) ---
            h = jnp.zeros((Bp, H2), jnp.float32)
            c = jnp.zeros((Bp, H2), jnp.float32)
            outs_f = [None] * T
            outs_b = [None] * T
            for t in range(T):
                # fwd processes position t, bwd processes position T-1-t.
                g_f = gx[t * Bp:(t + 1) * Bp, :]
                g_b = gx[(T - 1 - t) * Bp:(T - t) * Bp, :]
                gates = (jnp.where(use_bwd_cols, g_b, g_f)
                         + jnp.dot(h.astype(jnp.bfloat16), whh_bf,
                                   preferred_element_type=jnp.float32))

                sig = jax.nn.sigmoid(gates[:, 0:3 * H2])             # i | f | o
                i_g = sig[:, 0:H2]
                f_g = sig[:, H2:2 * H2]
                o_g = sig[:, 2 * H2:3 * H2]
                g_g = jnp.tanh(gates[:, 3 * H2:4 * H2])
                c_new = f_g * c + i_g * g_g
                h_new = o_g * jnp.tanh(c_new)

                # packed-sequence masking: update only while position < length
                m = step_mask[t]
                c = jnp.where(m, c_new, c)
                h = jnp.where(m, h_new, h)

                if l < n_layers - 1:            # last layer's sequence is unused
                    h_out = jnp.where(m, h_new, 0.0)                 # zero padding
                    outs_f[t] = h_out[:, 0:H]
                    outs_b[T - 1 - t] = h_out[:, H:H2]

            if l < n_layers - 1:
                # single [T*Bp, 2H] operand for the next layer's ONE projection dot
                seq_bf = jnp.concatenate(
                    [jnp.concatenate([outs_f[t], outs_b[t]], axis=1)
                     for t in range(T)], axis=0).astype(jnp.bfloat16)

        # ---- final Linear on concat(h_fwd_last, h_bwd_last) = h -------------
        out_ref[...] = (jnp.dot(h, fc_w_ref[...],
                                preferred_element_type=jnp.float32)
                        + fc_b_ref[...]).astype(out_ref.dtype)

    return kernel


def _full_spec(shape):
    nd = len(shape)
    return pl.BlockSpec(shape, lambda i, _nd=nd: (0,) * _nd)


# ------------------------------ model (forward) --------------------------------
def rnn_forward(params, text, text_lengths):
    """Equivalent of RNN.forward(text, text_lengths); text is [T, B] int32."""
    T, B = text.shape
    H = params["lstm"][0]["whh_bd"].shape[0] // 2
    OUT = params["fc"]["out_dim"]
    OUT_PAD = params["fc"]["w_t"].shape[1]
    V = params["embedding"].shape[0]
    n_layers = len(params["lstm"])

    Bp = ((B + 7) // 8) * 8                    # pad batch to a sublane multiple

    # token ids, time-major rows (row t*Bp + b == position t, batch b)
    tok2d = jnp.pad(text.astype(jnp.int32),
                    ((0, 0), (0, Bp - B))).reshape(T * Bp, 1)
    lengths = jnp.pad(text_lengths.astype(jnp.int32), (0, Bp - B))[:, None]

    inputs = [lengths, tok2d, params["embedding"]]
    for layer in params["lstm"]:
        inputs += [layer["wih_fb_t"], layer["whh_bd"], layer["bias_fb"]]
    inputs += [params["fc"]["w_t"], params["fc"]["b"]]

    out = pl.pallas_call(
        _make_rnn_kernel(n_layers, T, Bp, H, V),
        out_shape=jax.ShapeDtypeStruct((Bp, OUT_PAD), jnp.float32),
        grid=(1,),
        in_specs=[_full_spec(a.shape) for a in inputs],
        out_specs=pl.BlockSpec((Bp, OUT_PAD), lambda i: (0, 0)),
        compiler_params=pltpu.CompilerParams(
            dimension_semantics=("arbitrary",),
            vmem_limit_bytes=32 * 1024 * 1024),
    )(*inputs)
    return out[:B, :OUT]


# ------------------------------ parameter packing ------------------------------
def _pack_lstm_layer(fwd, bwd, H):
    """Packs PyTorch-convention per-direction LSTM weights into the fused
    gate-major / direction-minor layout, gate order i,f,o,g. MXU weights bf16."""
    wih_f_t, wih_b_t = fwd["wih"].T, bwd["wih"].T          # [IN, 4H]
    whh_f_t, whh_b_t = fwd["whh"].T, bwd["whh"].T          # [H, 4H]
    b_f = fwd["bih"] + fwd["bhh"]                          # [4H]
    b_b = bwd["bih"] + bwd["bhh"]

    wih_cols, bias_cols, rows_f, rows_b = [], [], [], []
    zero = jnp.zeros((H, H), jnp.float32)
    # PyTorch gate order is i,f,g,o; repack as i,f,o,g (sigmoid gates contiguous)
    for k in (0, 1, 3, 2):
        sl = slice(k * H, (k + 1) * H)
        wih_cols += [wih_f_t[:, sl], wih_b_t[:, sl]]
        bias_cols += [b_f[sl], b_b[sl]]
        rows_f += [whh_f_t[:, sl], zero]
        rows_b += [zero, whh_b_t[:, sl]]

    return {
        "wih_fb_t": jnp.concatenate(wih_cols, axis=1).astype(jnp.bfloat16),   # [IN, 8H]
        "whh_bd": jnp.concatenate(
            [jnp.concatenate(rows_f, axis=1),
             jnp.concatenate(rows_b, axis=1)], axis=0).astype(jnp.bfloat16),  # [2H, 8H]
        "bias_fb": jnp.concatenate(bias_cols)[None, :],                       # [1, 8H] f32
    }


def init_params(key, vocab_size, embedding_dim, hidden_dim, output_dim, n_layers):
    H = hidden_dim

    def uni(k, shape, scale):
        return jax.random.uniform(k, shape, jnp.float32, -scale, scale)

    keys = iter(jax.random.split(key, 1 + n_layers * 2 * 4 + 2))

    params = {"embedding": jax.random.normal(
        next(keys), (vocab_size, embedding_dim), jnp.float32)}        # nn.Embedding N(0,1)

    k_lstm = 1.0 / float(H) ** 0.5                                    # nn.LSTM U(-1/sqrt(H), .)
    layers = []
    for l in range(n_layers):
        in_size = embedding_dim if l == 0 else 2 * H
        raw = {}
        for d in ("f", "b"):
            raw[d] = dict(wih=uni(next(keys), (4 * H, in_size), k_lstm),
                          whh=uni(next(keys), (4 * H, H), k_lstm),
                          bih=uni(next(keys), (4 * H,), k_lstm),
                          bhh=uni(next(keys), (4 * H,), k_lstm))
        layers.append(_pack_lstm_layer(raw["f"], raw["b"], H))
    params["lstm"] = layers

    k_fc = 1.0 / float(2 * H) ** 0.5                                  # nn.Linear(2H, OUT)
    w_fc = uni(next(keys), (output_dim, 2 * H), k_fc)
    b_fc = uni(next(keys), (output_dim,), k_fc)
    out_pad = ((output_dim + 127) // 128) * 128                       # lane-dense store
    params["fc"] = {
        "w_t": jnp.pad(w_fc.T, ((0, 0), (0, out_pad - output_dim))),  # [2H, OUT_PAD]
        "b": jnp.pad(b_fc, (0, out_pad - output_dim))[None, :],       # [1, OUT_PAD]
        "out_dim": output_dim,
    }
    return params


# ------------------------------------ main -------------------------------------
if __name__ == "__main__":
    vocab_size = 50
    embedding_dim = 16
    hidden_dim = 32
    output_dim = 10
    n_layers = 2
    # bidirectional=True (fc expects hidden_dim * 2); dropout=0.0 -> identity.

    T, B = 8, 2

    key = jax.random.PRNGKey(0)
    pkey, tkey = jax.random.split(key)

    params = init_params(pkey, vocab_size, embedding_dim, hidden_dim,
                         output_dim, n_layers)

    text = jax.random.randint(tkey, (T, B), 0, vocab_size, dtype=jnp.int32)
    text_lengths = jnp.array([8, 5], dtype=jnp.int32)   # descending, like packing

    out = jax.block_until_ready(rnn_forward(params, text, text_lengths))

    assert out.shape == (B, output_dim), out.shape
    assert out.dtype == jnp.float32, out.dtype
    assert bool(jnp.all(jnp.isfinite(out)))
    print("KERNEL_OK")
</pallas_src>

<mosaic_0001>
module attributes {stable_mosaic.version = 11 : i64} {
  func.func @kernel(%arg0: i32, %arg1: memref<8x1xi32, #tpu.memory_space<vmem>>, %arg2: memref<64x1xi32, #tpu.memory_space<vmem>>, %arg3: memref<50x16xf32, #tpu.memory_space<vmem>>, %arg4: memref<16x256xbf16, #tpu.memory_space<vmem>>, %arg5: memref<64x256xbf16, #tpu.memory_space<vmem>>, %arg6: memref<1x256xf32, #tpu.memory_space<vmem>>, %arg7: memref<64x256xbf16, #tpu.memory_space<vmem>>, %arg8: memref<64x256xbf16, #tpu.memory_space<vmem>>, %arg9: memref<1x256xf32, #tpu.memory_space<vmem>>, %arg10: memref<64x128xf32, #tpu.memory_space<vmem>>, %arg11: memref<1x128xf32, #tpu.memory_space<vmem>>, %arg12: memref<8x128xf32, #tpu.memory_space<vmem>>) attributes {dimension_semantics = [#tpu.dimension_semantics<arbitrary>], iteration_bounds = array<i64: 1>, scalar_prefetch = 0 : i64, scratch_operands = 0 : i64, tpu.core_type = #tpu.core_type<tc>, window_params = [{pipeline_mode = #tpu.pipeline_mode<synchronous>, transform_indices = @transform_0, window_bounds = array<i64: 8, 1>}, {pipeline_mode = #tpu.pipeline_mode<synchronous>, transform_indices = @transform_1, window_bounds = array<i64: 64, 1>}, {pipeline_mode = #tpu.pipeline_mode<synchronous>, transform_indices = @transform_2, window_bounds = array<i64: 50, 16>}, {pipeline_mode = #tpu.pipeline_mode<synchronous>, transform_indices = @transform_3, window_bounds = array<i64: 16, 256>}, {pipeline_mode = #tpu.pipeline_mode<synchronous>, transform_indices = @transform_4, window_bounds = array<i64: 64, 256>}, {pipeline_mode = #tpu.pipeline_mode<synchronous>, transform_indices = @transform_5, window_bounds = array<i64: 1, 256>}, {pipeline_mode = #tpu.pipeline_mode<synchronous>, transform_indices = @transform_6, window_bounds = array<i64: 64, 256>}, {pipeline_mode = #tpu.pipeline_mode<synchronous>, transform_indices = @transform_7, window_bounds = array<i64: 64, 256>}, {pipeline_mode = #tpu.pipeline_mode<synchronous>, transform_indices = @transform_8, window_bounds = array<i64: 1, 256>}, {pipeline_mode = #tpu.pipeline_mode<synchronous>, transform_indices = @transform_9, window_bounds = array<i64: 64, 128>}, {pipeline_mode = #tpu.pipeline_mode<synchronous>, transform_indices = @transform_10, window_bounds = array<i64: 1, 128>}, {pipeline_mode = #tpu.pipeline_mode<synchronous>, transform_indices = @transform_11, window_bounds = array<i64: 8, 128>}]} {
    %c0 = arith.constant 0 : index
    %c0_0 = arith.constant 0 : index
    %0 = vector.load %arg1[%c0, %c0_0] : memref<8x1xi32, #tpu.memory_space<vmem>>, vector<8x1xi32>
    %1 = tpu.iota {dimensions = array<i32: 1>} : vector<8x64xi32>
    %c32_i32 = arith.constant 32 : i32
    %2 = vector.broadcast %c32_i32 : i32 to vector<8x64xi32>
    %3 = arith.cmpi sge, %1, %2 : vector<8x64xi32>
    %4 = tpu.concatenate %1, %1, %1, %1 in 1 : vector<8x64xi32>, vector<8x64xi32>, vector<8x64xi32>, vector<8x64xi32> -> vector<8x256xi32>
    %c32_i32_1 = arith.constant 32 : i32
    %5 = vector.broadcast %c32_i32_1 : i32 to vector<8x256xi32>
    %6 = arith.cmpi sge, %4, %5 : vector<8x256xi32>
    %c7_i32 = arith.constant 7 : i32
    %c0_i32 = arith.constant 0 : i32
    %7 = vector.broadcast %c7_i32 : i32 to vector<8x64xi32>
    %8 = vector.broadcast %c0_i32 : i32 to vector<8x64xi32>
    %9 = arith.select %3, %7, %8 : vector<8x64xi1>, vector<8x64xi32>
    %10 = vector.broadcast %0 : vector<8x1xi32> to vector<8x64xi32>
    %11 = arith.cmpi slt, %9, %10 : vector<8x64xi32>
    %c6_i32 = arith.constant 6 : i32
    %c1_i32 = arith.constant 1 : i32
    %12 = vector.broadcast %c6_i32 : i32 to vector<8x64xi32>
    %13 = vector.broadcast %c1_i32 : i32 to vector<8x64xi32>
    %14 = arith.select %3, %12, %13 : vector<8x64xi1>, vector<8x64xi32>
    %15 = vector.broadcast %0 : vector<8x1xi32> to vector<8x64xi32>
    %16 = arith.cmpi slt, %14, %15 : vector<8x64xi32>
    %c5_i32 = arith.constant 5 : i32
    %c2_i32 = arith.constant 2 : i32
    %17 = vector.broadcast %c5_i32 : i32 to vector<8x64xi32>
    %18 = vector.broadcast %c2_i32 : i32 to vector<8x64xi32>
    %19 = arith.select %3, %17, %18 : vector<8x64xi1>, vector<8x64xi32>
    %20 = vector.broadcast %0 : vector<8x1xi32> to vector<8x64xi32>
    %21 = arith.cmpi slt, %19, %20 : vector<8x64xi32>
    %c4_i32 = arith.constant 4 : i32
    %c3_i32 = arith.constant 3 : i32
    %22 = vector.broadcast %c4_i32 : i32 to vector<8x64xi32>
    %23 = vector.broadcast %c3_i32 : i32 to vector<8x64xi32>
    %24 = arith.select %3, %22, %23 : vector<8x64xi1>, vector<8x64xi32>
    %25 = vector.broadcast %0 : vector<8x1xi32> to vector<8x64xi32>
    %26 = arith.cmpi slt, %24, %25 : vector<8x64xi32>
    %c3_i32_2 = arith.constant 3 : i32
    %c4_i32_3 = arith.constant 4 : i32
    %27 = vector.broadcast %c3_i32_2 : i32 to vector<8x64xi32>
    %28 = vector.broadcast %c4_i32_3 : i32 to vector<8x64xi32>
    %29 = arith.select %3, %27, %28 : vector<8x64xi1>, vector<8x64xi32>
    %30 = vector.broadcast %0 : vector<8x1xi32> to vector<8x64xi32>
    %31 = arith.cmpi slt, %29, %30 : vector<8x64xi32>
    %c2_i32_4 = arith.constant 2 : i32
    %c5_i32_5 = arith.constant 5 : i32
    %32 = vector.broadcast %c2_i32_4 : i32 to vector<8x64xi32>
    %33 = vector.broadcast %c5_i32_5 : i32 to vector<8x64xi32>
    %34 = arith.select %3, %32, %33 : vector<8x64xi1>, vector<8x64xi32>
    %35 = vector.broadcast %0 : vector<8x1xi32> to vector<8x64xi32>
    %36 = arith.cmpi slt, %34, %35 : vector<8x64xi32>
    %c1_i32_6 = arith.constant 1 : i32
    %c6_i32_7 = arith.constant 6 : i32
    %37 = vector.broadcast %c1_i32_6 : i32 to vector<8x64xi32>
    %38 = vector.broadcast %c6_i32_7 : i32 to vector<8x64xi32>
    %39 = arith.select %3, %37, %38 : vector<8x64xi1>, vector<8x64xi32>
    %40 = vector.broadcast %0 : vector<8x1xi32> to vector<8x64xi32>
    %41 = arith.cmpi slt, %39, %40 : vector<8x64xi32>
    %c0_i32_8 = arith.constant 0 : i32
    %c7_i32_9 = arith.constant 7 : i32
    %42 = vector.broadcast %c0_i32_8 : i32 to vector<8x64xi32>
    %43 = vector.broadcast %c7_i32_9 : i32 to vector<8x64xi32>
    %44 = arith.select %3, %42, %43 : vector<8x64xi1>, vector<8x64xi32>
    %45 = vector.broadcast %0 : vector<8x1xi32> to vector<8x64xi32>
    %46 = arith.cmpi slt, %44, %45 : vector<8x64xi32>
    %c0_10 = arith.constant 0 : index
    %c0_11 = arith.constant 0 : index
    %47 = vector.load %arg2[%c0_10, %c0_11] : memref<64x1xi32, #tpu.memory_space<vmem>>, vector<64x1xi32>
    %48 = tpu.iota {dimensions = array<i32: 1>} : vector<64x50xi32>
    %49 = vector.broadcast %47 : vector<64x1xi32> to vector<64x50xi32>
    %50 = arith.cmpi eq, %48, %49 : vector<64x50xi32>
    %51 = arith.extui %50 : vector<64x50xi1> to vector<64x50xi32>
    %52 = arith.sitofp %51 : vector<64x50xi32> to vector<64x50xf32>
    %53 = arith.truncf %52 : vector<64x50xf32> to vector<64x50xbf16>
    %c0_12 = arith.constant 0 : index
    %c0_13 = arith.constant 0 : index
    %54 = vector.load %arg3[%c0_12, %c0_13] : memref<50x16xf32, #tpu.memory_space<vmem>>, vector<50x16xf32>
    %55 = arith.truncf %54 : vector<50x16xf32> to vector<50x16xbf16>
    %cst = arith.constant dense<0.000000e+00> : vector<64x16xf32>
    %56 = tpu.matmul %53, %55, %cst {dimension_numbers = #tpu.dot_dimension_numbers<[1], [0], [0], [1], [0, 0, 1, 1], [], []>} : vector<64x50xbf16>, vector<50x16xbf16>, vector<64x16xf32> -> vector<64x16xf32>
    %57 = arith.truncf %56 : vector<64x16xf32> to vector<64x16xbf16>
    %c0_14 = arith.constant 0 : index
    %c0_15 = arith.constant 0 : index
    %58 = vector.load %arg4[%c0_14, %c0_15] : memref<16x256xbf16, #tpu.memory_space<vmem>>, vector<16x256xbf16>
    %cst_16 = arith.constant dense<0.000000e+00> : vector<64x256xf32>
    %59 = tpu.matmul %57, %58, %cst_16 {dimension_numbers = #tpu.dot_dimension_numbers<[1], [0], [0], [1], [0, 0, 1, 1], [], []>} : vector<64x16xbf16>, vector<16x256xbf16>, vector<64x256xf32> -> vector<64x256xf32>
    %c0_17 = arith.constant 0 : index
    %c0_18 = arith.constant 0 : index
    %60 = vector.load %arg6[%c0_17, %c0_18] : memref<1x256xf32, #tpu.memory_space<vmem>>, vector<1x256xf32>
    %61 = vector.broadcast %60 : vector<1x256xf32> to vector<64x256xf32>
    %62 = arith.addf %59, %61 : vector<64x256xf32>
    %c0_19 = arith.constant 0 : index
    %c0_20 = arith.constant 0 : index
    %63 = vector.load %arg5[%c0_19, %c0_20] : memref<64x256xbf16, #tpu.memory_space<vmem>>, vector<64x256xbf16>
    %cst_21 = arith.constant 0.000000e+00 : f32
    %64 = vector.broadcast %cst_21 : f32 to vector<8x64xf32>
    %cst_22 = arith.constant 0.000000e+00 : f32
    %65 = vector.broadcast %cst_22 : f32 to vector<8x64xf32>
    %66 = vector.extract_strided_slice %62 {offsets = [0, 0], sizes = [8, 256], strides = [1, 1]} : vector<64x256xf32> to vector<8x256xf32>
    %67 = vector.extract_strided_slice %62 {offsets = [56, 0], sizes = [8, 256], strides = [1, 1]} : vector<64x256xf32> to vector<8x256xf32>
    %68 = arith.select %6, %67, %66 : vector<8x256xi1>, vector<8x256xf32>
    %69 = arith.truncf %64 : vector<8x64xf32> to vector<8x64xbf16>
    %cst_23 = arith.constant dense<0.000000e+00> : vector<8x256xf32>
    %70 = tpu.matmul %69, %63, %cst_23 {dimension_numbers = #tpu.dot_dimension_numbers<[1], [0], [0], [1], [0, 0, 1, 1], [], []>} : vector<8x64xbf16>, vector<64x256xbf16>, vector<8x256xf32> -> vector<8x256xf32>
    %71 = arith.addf %68, %70 : vector<8x256xf32>
    %72 = vector.extract_strided_slice %71 {offsets = [0, 0], sizes = [8, 192], strides = [1, 1]} : vector<8x256xf32> to vector<8x192xf32>
    %73 = arith.negf %72 : vector<8x192xf32>
    %74 = math.exp %73 : vector<8x192xf32>
    %cst_24 = arith.constant 1.000000e+00 : f32
    %75 = vector.broadcast %cst_24 : f32 to vector<8x192xf32>
    %76 = arith.addf %75, %74 : vector<8x192xf32>
    %77 = arith.divf %75, %76 : vector<8x192xf32>
    %78 = vector.extract_strided_slice %77 {offsets = [0, 0], sizes = [8, 64], strides = [1, 1]} : vector<8x192xf32> to vector<8x64xf32>
    %79 = vector.extract_strided_slice %77 {offsets = [0, 64], sizes = [8, 64], strides = [1, 1]} : vector<8x192xf32> to vector<8x64xf32>
    %80 = vector.extract_strided_slice %77 {offsets = [0, 128], sizes = [8, 64], strides = [1, 1]} : vector<8x192xf32> to vector<8x64xf32>
    %81 = vector.extract_strided_slice %71 {offsets = [0, 192], sizes = [8, 64], strides = [1, 1]} : vector<8x256xf32> to vector<8x64xf32>
    %82 = math.tanh %81 : vector<8x64xf32>
    %83 = arith.mulf %79, %65 : vector<8x64xf32>
    %84 = arith.mulf %78, %82 : vector<8x64xf32>
    %85 = arith.addf %83, %84 : vector<8x64xf32>
    %86 = math.tanh %85 : vector<8x64xf32>
    %87 = arith.mulf %80, %86 : vector<8x64xf32>
    %88 = arith.select %11, %85, %65 : vector<8x64xi1>, vector<8x64xf32>
    %89 = arith.select %11, %87, %64 : vector<8x64xi1>, vector<8x64xf32>
    %cst_25 = arith.constant 0.000000e+00 : f32
    %90 = vector.broadcast %cst_25 : f32 to vector<8x64xf32>
    %91 = arith.select %11, %87, %90 : vector<8x64xi1>, vector<8x64xf32>
    %92 = vector.extract_strided_slice %91 {offsets = [0, 0], sizes = [8, 32], strides = [1, 1]} : vector<8x64xf32> to vector<8x32xf32>
    %93 = vector.extract_strided_slice %91 {offsets = [0, 32], sizes = [8, 32], strides = [1, 1]} : vector<8x64xf32> to vector<8x32xf32>
    %94 = vector.extract_strided_slice %62 {offsets = [8, 0], sizes = [8, 256], strides = [1, 1]} : vector<64x256xf32> to vector<8x256xf32>
    %95 = vector.extract_strided_slice %62 {offsets = [48, 0], sizes = [8, 256], strides = [1, 1]} : vector<64x256xf32> to vector<8x256xf32>
    %96 = arith.select %6, %95, %94 : vector<8x256xi1>, vector<8x256xf32>
    %97 = arith.truncf %89 : vector<8x64xf32> to vector<8x64xbf16>
    %cst_26 = arith.constant dense<0.000000e+00> : vector<8x256xf32>
    %98 = tpu.matmul %97, %63, %cst_26 {dimension_numbers = #tpu.dot_dimension_numbers<[1], [0], [0], [1], [0, 0, 1, 1], [], []>} : vector<8x64xbf16>, vector<64x256xbf16>, vector<8x256xf32> -> vector<8x256xf32>
    %99 = arith.addf %96, %98 : vector<8x256xf32>
    %100 = vector.extract_strided_slice %99 {offsets = [0, 0], sizes = [8, 192], strides = [1, 1]} : vector<8x256xf32> to vector<8x192xf32>
    %101 = arith.negf %100 : vector<8x192xf32>
    %102 = math.exp %101 : vector<8x192xf32>
    %cst_27 = arith.constant 1.000000e+00 : f32
    %103 = vector.broadcast %cst_27 : f32 to vector<8x192xf32>
    %104 = arith.addf %103, %102 : vector<8x192xf32>
    %105 = arith.divf %103, %104 : vector<8x192xf32>
    %106 = vector.extract_strided_slice %105 {offsets = [0, 0], sizes = [8, 64], strides = [1, 1]} : vector<8x192xf32> to vector<8x64xf32>
    %107 = vector.extract_strided_slice %105 {offsets = [0, 64], sizes = [8, 64], strides = [1, 1]} : vector<8x192xf32> to vector<8x64xf32>
    %108 = vector.extract_strided_slice %105 {offsets = [0, 128], sizes = [8, 64], strides = [1, 1]} : vector<8x192xf32> to vector<8x64xf32>
    %109 = vector.extract_strided_slice %99 {offsets = [0, 192], sizes = [8, 64], strides = [1, 1]} : vector<8x256xf32> to vector<8x64xf32>
    %110 = math.tanh %109 : vector<8x64xf32>
    %111 = arith.mulf %107, %88 : vector<8x64xf32>
    %112 = arith.mulf %106, %110 : vector<8x64xf32>
    %113 = arith.addf %111, %112 : vector<8x64xf32>
    %114 = math.tanh %113 : vector<8x64xf32>
    %115 = arith.mulf %108, %114 : vector<8x64xf32>
    %116 = arith.select %16, %113, %88 : vector<8x64xi1>, vector<8x64xf32>
    %117 = arith.select %16, %115, %89 : vector<8x64xi1>, vector<8x64xf32>
    %cst_28 = arith.constant 0.000000e+00 : f32
    %118 = vector.broadcast %cst_28 : f32 to vector<8x64xf32>
    %119 = arith.select %16, %115, %118 : vector<8x64xi1>, vector<8x64xf32>
    %120 = vector.extract_strided_slice %119 {offsets = [0, 0], sizes = [8, 32], strides = [1, 1]} : vector<8x64xf32> to vector<8x32xf32>
    %121 = vector.extract_strided_slice %119 {offsets = [0, 32], sizes = [8, 32], strides = [1, 1]} : vector<8x64xf32> to vector<8x32xf32>
    %122 = vector.extract_strided_slice %62 {offsets = [16, 0], sizes = [8, 256], strides = [1, 1]} : vector<64x256xf32> to vector<8x256xf32>
    %123 = vector.extract_strided_slice %62 {offsets = [40, 0], sizes = [8, 256], strides = [1, 1]} : vector<64x256xf32> to vector<8x256xf32>
    %124 = arith.select %6, %123, %122 : vector<8x256xi1>, vector<8x256xf32>
    %125 = arith.truncf %117 : vector<8x64xf32> to vector<8x64xbf16>
    %cst_29 = arith.constant dense<0.000000e+00> : vector<8x256xf32>
    %126 = tpu.matmul %125, %63, %cst_29 {dimension_numbers = #tpu.dot_dimension_numbers<[1], [0], [0], [1], [0, 0, 1, 1], [], []>} : vector<8x64xbf16>, vector<64x256xbf16>, vector<8x256xf32> -> vector<8x256xf32>
    %127 = arith.addf %124, %126 : vector<8x256xf32>
    %128 = vector.extract_strided_slice %127 {offsets = [0, 0], sizes = [8, 192], strides = [1, 1]} : vector<8x256xf32> to vector<8x192xf32>
    %129 = arith.negf %128 : vector<8x192xf32>
    %130 = math.exp %129 : vector<8x192xf32>
    %cst_30 = arith.constant 1.000000e+00 : f32
    %131 = vector.broadcast %cst_30 : f32 to vector<8x192xf32>
    %132 = arith.addf %131, %130 : vector<8x192xf32>
    %133 = arith.divf %131, %132 : vector<8x192xf32>
    %134 = vector.extract_strided_slice %133 {offsets = [0, 0], sizes = [8, 64], strides = [1, 1]} : vector<8x192xf32> to vector<8x64xf32>
    %135 = vector.extract_strided_slice %133 {offsets = [0, 64], sizes = [8, 64], strides = [1, 1]} : vector<8x192xf32> to vector<8x64xf32>
    %136 = vector.extract_strided_slice %133 {offsets = [0, 128], sizes = [8, 64], strides = [1, 1]} : vector<8x192xf32> to vector<8x64xf32>
    %137 = vector.extract_strided_slice %127 {offsets = [0, 192], sizes = [8, 64], strides = [1, 1]} : vector<8x256xf32> to vector<8x64xf32>
    %138 = math.tanh %137 : vector<8x64xf32>
    %139 = arith.mulf %135, %116 : vector<8x64xf32>
    %140 = arith.mulf %134, %138 : vector<8x64xf32>
    %141 = arith.addf %139, %140 : vector<8x64xf32>
    %142 = math.tanh %141 : vector<8x64xf32>
    %143 = arith.mulf %136, %142 : vector<8x64xf32>
    %144 = arith.select %21, %141, %116 : vector<8x64xi1>, vector<8x64xf32>
    %145 = arith.select %21, %143, %117 : vector<8x64xi1>, vector<8x64xf32>
    %cst_31 = arith.constant 0.000000e+00 : f32
    %146 = vector.broadcast %cst_31 : f32 to vector<8x64xf32>
    %147 = arith.select %21, %143, %146 : vector<8x64xi1>, vector<8x64xf32>
    %148 = vector.extract_strided_slice %147 {offsets = [0, 0], sizes = [8, 32], strides = [1, 1]} : vector<8x64xf32> to vector<8x32xf32>
    %149 = vector.extract_strided_slice %147 {offsets = [0, 32], sizes = [8, 32], strides = [1, 1]} : vector<8x64xf32> to vector<8x32xf32>
    %150 = vector.extract_strided_slice %62 {offsets = [24, 0], sizes = [8, 256], strides = [1, 1]} : vector<64x256xf32> to vector<8x256xf32>
    %151 = vector.extract_strided_slice %62 {offsets = [32, 0], sizes = [8, 256], strides = [1, 1]} : vector<64x256xf32> to vector<8x256xf32>
    %152 = arith.select %6, %151, %150 : vector<8x256xi1>, vector<8x256xf32>
    %153 = arith.truncf %145 : vector<8x64xf32> to vector<8x64xbf16>
    %cst_32 = arith.constant dense<0.000000e+00> : vector<8x256xf32>
    %154 = tpu.matmul %153, %63, %cst_32 {dimension_numbers = #tpu.dot_dimension_numbers<[1], [0], [0], [1], [0, 0, 1, 1], [], []>} : vector<8x64xbf16>, vector<64x256xbf16>, vector<8x256xf32> -> vector<8x256xf32>
    %155 = arith.addf %152, %154 : vector<8x256xf32>
    %156 = vector.extract_strided_slice %155 {offsets = [0, 0], sizes = [8, 192], strides = [1, 1]} : vector<8x256xf32> to vector<8x192xf32>
    %157 = arith.negf %156 : vector<8x192xf32>
    %158 = math.exp %157 : vector<8x192xf32>
    %cst_33 = arith.constant 1.000000e+00 : f32
    %159 = vector.broadcast %cst_33 : f32 to vector<8x192xf32>
    %160 = arith.addf %159, %158 : vector<8x192xf32>
    %161 = arith.divf %159, %160 : vector<8x192xf32>
    %162 = vector.extract_strided_slice %161 {offsets = [0, 0], sizes = [8, 64], strides = [1, 1]} : vector<8x192xf32> to vector<8x64xf32>
    %163 = vector.extract_strided_slice %161 {offsets = [0, 64], sizes = [8, 64], strides = [1, 1]} : vector<8x192xf32> to vector<8x64xf32>
    %164 = vector.extract_strided_slice %161 {offsets = [0, 128], sizes = [8, 64], strides = [1, 1]} : vector<8x192xf32> to vector<8x64xf32>
    %165 = vector.extract_strided_slice %155 {offsets = [0, 192], sizes = [8, 64], strides = [1, 1]} : vector<8x256xf32> to vector<8x64xf32>
    %166 = math.tanh %165 : vector<8x64xf32>
    %167 = arith.mulf %163, %144 : vector<8x64xf32>
    %168 = arith.mulf %162, %166 : vector<8x64xf32>
    %169 = arith.addf %167, %168 : vector<8x64xf32>
    %170 = math.tanh %169 : vector<8x64xf32>
    %171 = arith.mulf %164, %170 : vector<8x64xf32>
    %172 = arith.select %26, %169, %144 : vector<8x64xi1>, vector<8x64xf32>
    %173 = arith.select %26, %171, %145 : vector<8x64xi1>, vector<8x64xf32>
    %cst_34 = arith.constant 0.000000e+00 : f32
    %174 = vector.broadcast %cst_34 : f32 to vector<8x64xf32>
    %175 = arith.select %26, %171, %174 : vector<8x64xi1>, vector<8x64xf32>
    %176 = vector.extract_strided_slice %175 {offsets = [0, 0], sizes = [8, 32], strides = [1, 1]} : vector<8x64xf32> to vector<8x32xf32>
    %177 = vector.extract_strided_slice %175 {offsets = [0, 32], sizes = [8, 32], strides = [1, 1]} : vector<8x64xf32> to vector<8x32xf32>
    %178 = vector.extract_strided_slice %62 {offsets = [32, 0], sizes = [8, 256], strides = [1, 1]} : vector<64x256xf32> to vector<8x256xf32>
    %179 = vector.extract_strided_slice %62 {offsets = [24, 0], sizes = [8, 256], strides = [1, 1]} : vector<64x256xf32> to vector<8x256xf32>
    %180 = arith.select %6, %179, %178 : vector<8x256xi1>, vector<8x256xf32>
    %181 = arith.truncf %173 : vector<8x64xf32> to vector<8x64xbf16>
    %cst_35 = arith.constant dense<0.000000e+00> : vector<8x256xf32>
    %182 = tpu.matmul %181, %63, %cst_35 {dimension_numbers = #tpu.dot_dimension_numbers<[1], [0], [0], [1], [0, 0, 1, 1], [], []>} : vector<8x64xbf16>, vector<64x256xbf16>, vector<8x256xf32> -> vector<8x256xf32>
    %183 = arith.addf %180, %182 : vector<8x256xf32>
    %184 = vector.extract_strided_slice %183 {offsets = [0, 0], sizes = [8, 192], strides = [1, 1]} : vector<8x256xf32> to vector<8x192xf32>
    %185 = arith.negf %184 : vector<8x192xf32>
    %186 = math.exp %185 : vector<8x192xf32>
    %cst_36 = arith.constant 1.000000e+00 : f32
    %187 = vector.broadcast %cst_36 : f32 to vector<8x192xf32>
    %188 = arith.addf %187, %186 : vector<8x192xf32>
    %189 = arith.divf %187, %188 : vector<8x192xf32>
    %190 = vector.extract_strided_slice %189 {offsets = [0, 0], sizes = [8, 64], strides = [1, 1]} : vector<8x192xf32> to vector<8x64xf32>
    %191 = vector.extract_strided_slice %189 {offsets = [0, 64], sizes = [8, 64], strides = [1, 1]} : vector<8x192xf32> to vector<8x64xf32>
    %192 = vector.extract_strided_slice %189 {offsets = [0, 128], sizes = [8, 64], strides = [1, 1]} : vector<8x192xf32> to vector<8x64xf32>
    %193 = vector.extract_strided_slice %183 {offsets = [0, 192], sizes = [8, 64], strides = [1, 1]} : vector<8x256xf32> to vector<8x64xf32>
    %194 = math.tanh %193 : vector<8x64xf32>
    %195 = arith.mulf %191, %172 : vector<8x64xf32>
    %196 = arith.mulf %190, %194 : vector<8x64xf32>
    %197 = arith.addf %195, %196 : vector<8x64xf32>
    %198 = math.tanh %197 : vector<8x64xf32>
    %199 = arith.mulf %192, %198 : vector<8x64xf32>
    %200 = arith.select %31, %197, %172 : vector<8x64xi1>, vector<8x64xf32>
    %201 = arith.select %31, %199, %173 : vector<8x64xi1>, vector<8x64xf32>
    %cst_37 = arith.constant 0.000000e+00 : f32
    %202 = vector.broadcast %cst_37 : f32 to vector<8x64xf32>
    %203 = arith.select %31, %199, %202 : vector<8x64xi1>, vector<8x64xf32>
    %204 = vector.extract_strided_slice %203 {offsets = [0, 0], sizes = [8, 32], strides = [1, 1]} : vector<8x64xf32> to vector<8x32xf32>
    %205 = vector.extract_strided_slice %203 {offsets = [0, 32], sizes = [8, 32], strides = [1, 1]} : vector<8x64xf32> to vector<8x32xf32>
    %206 = vector.extract_strided_slice %62 {offsets = [40, 0], sizes = [8, 256], strides = [1, 1]} : vector<64x256xf32> to vector<8x256xf32>
    %207 = vector.extract_strided_slice %62 {offsets = [16, 0], sizes = [8, 256], strides = [1, 1]} : vector<64x256xf32> to vector<8x256xf32>
    %208 = arith.select %6, %207, %206 : vector<8x256xi1>, vector<8x256xf32>
    %209 = arith.truncf %201 : vector<8x64xf32> to vector<8x64xbf16>
    %cst_38 = arith.constant dense<0.000000e+00> : vector<8x256xf32>
    %210 = tpu.matmul %209, %63, %cst_38 {dimension_numbers = #tpu.dot_dimension_numbers<[1], [0], [0], [1], [0, 0, 1, 1], [], []>} : vector<8x64xbf16>, vector<64x256xbf16>, vector<8x256xf32> -> vector<8x256xf32>
    %211 = arith.addf %208, %210 : vector<8x256xf32>
    %212 = vector.extract_strided_slice %211 {offsets = [0, 0], sizes = [8, 192], strides = [1, 1]} : vector<8x256xf32> to vector<8x192xf32>
    %213 = arith.negf %212 : vector<8x192xf32>
    %214 = math.exp %213 : vector<8x192xf32>
    %cst_39 = arith.constant 1.000000e+00 : f32
    %215 = vector.broadcast %cst_39 : f32 to vector<8x192xf32>
    %216 = arith.addf %215, %214 : vector<8x192xf32>
    %217 = arith.divf %215, %216 : vector<8x192xf32>
    %218 = vector.extract_strided_slice %217 {offsets = [0, 0], sizes = [8, 64], strides = [1, 1]} : vector<8x192xf32> to vector<8x64xf32>
    %219 = vector.extract_strided_slice %217 {offsets = [0, 64], sizes = [8, 64], strides = [1, 1]} : vector<8x192xf32> to vector<8x64xf32>
    %220 = vector.extract_strided_slice %217 {offsets = [0, 128], sizes = [8, 64], strides = [1, 1]} : vector<8x192xf32> to vector<8x64xf32>
    %221 = vector.extract_strided_slice %211 {offsets = [0, 192], sizes = [8, 64], strides = [1, 1]} : vector<8x256xf32> to vector<8x64xf32>
    %222 = math.tanh %221 : vector<8x64xf32>
    %223 = arith.mulf %219, %200 : vector<8x64xf32>
    %224 = arith.mulf %218, %222 : vector<8x64xf32>
    %225 = arith.addf %223, %224 : vector<8x64xf32>
    %226 = math.tanh %225 : vector<8x64xf32>
    %227 = arith.mulf %220, %226 : vector<8x64xf32>
    %228 = arith.select %36, %225, %200 : vector<8x64xi1>, vector<8x64xf32>
    %229 = arith.select %36, %227, %201 : vector<8x64xi1>, vector<8x64xf32>
    %cst_40 = arith.constant 0.000000e+00 : f32
    %230 = vector.broadcast %cst_40 : f32 to vector<8x64xf32>
    %231 = arith.select %36, %227, %230 : vector<8x64xi1>, vector<8x64xf32>
    %232 = vector.extract_strided_slice %231 {offsets = [0, 0], sizes = [8, 32], strides = [1, 1]} : vector<8x64xf32> to vector<8x32xf32>
    %233 = vector.extract_strided_slice %231 {offsets = [0, 32], sizes = [8, 32], strides = [1, 1]} : vector<8x64xf32> to vector<8x32xf32>
    %234 = vector.extract_strided_slice %62 {offsets = [48, 0], sizes = [8, 256], strides = [1, 1]} : vector<64x256xf32> to vector<8x256xf32>
    %235 = vector.extract_strided_slice %62 {offsets = [8, 0], sizes = [8, 256], strides = [1, 1]} : vector<64x256xf32> to vector<8x256xf32>
    %236 = arith.select %6, %235, %234 : vector<8x256xi1>, vector<8x256xf32>
    %237 = arith.truncf %229 : vector<8x64xf32> to vector<8x64xbf16>
    %cst_41 = arith.constant dense<0.000000e+00> : vector<8x256xf32>
    %238 = tpu.matmul %237, %63, %cst_41 {dimension_numbers = #tpu.dot_dimension_numbers<[1], [0], [0], [1], [0, 0, 1, 1], [], []>} : vector<8x64xbf16>, vector<64x256xbf16>, vector<8x256xf32> -> vector<8x256xf32>
    %239 = arith.addf %236, %238 : vector<8x256xf32>
    %240 = vector.extract_strided_slice %239 {offsets = [0, 0], sizes = [8, 192], strides = [1, 1]} : vector<8x256xf32> to vector<8x192xf32>
    %241 = arith.negf %240 : vector<8x192xf32>
    %242 = math.exp %241 : vector<8x192xf32>
    %cst_42 = arith.constant 1.000000e+00 : f32
    %243 = vector.broadcast %cst_42 : f32 to vector<8x192xf32>
    %244 = arith.addf %243, %242 : vector<8x192xf32>
    %245 = arith.divf %243, %244 : vector<8x192xf32>
    %246 = vector.extract_strided_slice %245 {offsets = [0, 0], sizes = [8, 64], strides = [1, 1]} : vector<8x192xf32> to vector<8x64xf32>
    %247 = vector.extract_strided_slice %245 {offsets = [0, 64], sizes = [8, 64], strides = [1, 1]} : vector<8x192xf32> to vector<8x64xf32>
    %248 = vector.extract_strided_slice %245 {offsets = [0, 128], sizes = [8, 64], strides = [1, 1]} : vector<8x192xf32> to vector<8x64xf32>
    %249 = vector.extract_strided_slice %239 {offsets = [0, 192], sizes = [8, 64], strides = [1, 1]} : vector<8x256xf32> to vector<8x64xf32>
    %250 = math.tanh %249 : vector<8x64xf32>
    %251 = arith.mulf %247, %228 : vector<8x64xf32>
    %252 = arith.mulf %246, %250 : vector<8x64xf32>
    %253 = arith.addf %251, %252 : vector<8x64xf32>
    %254 = math.tanh %253 : vector<8x64xf32>
    %255 = arith.mulf %248, %254 : vector<8x64xf32>
    %256 = arith.select %41, %253, %228 : vector<8x64xi1>, vector<8x64xf32>
    %257 = arith.select %41, %255, %229 : vector<8x64xi1>, vector<8x64xf32>
    %cst_43 = arith.constant 0.000000e+00 : f32
    %258 = vector.broadcast %cst_43 : f32 to vector<8x64xf32>
    %259 = arith.select %41, %255, %258 : vector<8x64xi1>, vector<8x64xf32>
    %260 = vector.extract_strided_slice %259 {offsets = [0, 0], sizes = [8, 32], strides = [1, 1]} : vector<8x64xf32> to vector<8x32xf32>
    %261 = vector.extract_strided_slice %259 {offsets = [0, 32], sizes = [8, 32], strides = [1, 1]} : vector<8x64xf32> to vector<8x32xf32>
    %262 = vector.extract_strided_slice %62 {offsets = [56, 0], sizes = [8, 256], strides = [1, 1]} : vector<64x256xf32> to vector<8x256xf32>
    %263 = vector.extract_strided_slice %62 {offsets = [0, 0], sizes = [8, 256], strides = [1, 1]} : vector<64x256xf32> to vector<8x256xf32>
    %264 = arith.select %6, %263, %262 : vector<8x256xi1>, vector<8x256xf32>
    %265 = arith.truncf %257 : vector<8x64xf32> to vector<8x64xbf16>
    %cst_44 = arith.constant dense<0.000000e+00> : vector<8x256xf32>
    %266 = tpu.matmul %265, %63, %cst_44 {dimension_numbers = #tpu.dot_dimension_numbers<[1], [0], [0], [1], [0, 0, 1, 1], [], []>} : vector<8x64xbf16>, vector<64x256xbf16>, vector<8x256xf32> -> vector<8x256xf32>
    %267 = arith.addf %264, %266 : vector<8x256xf32>
    %268 = vector.extract_strided_slice %267 {offsets = [0, 0], sizes = [8, 192], strides = [1, 1]} : vector<8x256xf32> to vector<8x192xf32>
    %269 = arith.negf %268 : vector<8x192xf32>
    %270 = math.exp %269 : vector<8x192xf32>
    %cst_45 = arith.constant 1.000000e+00 : f32
    %271 = vector.broadcast %cst_45 : f32 to vector<8x192xf32>
    %272 = arith.addf %271, %270 : vector<8x192xf32>
    %273 = arith.divf %271, %272 : vector<8x192xf32>
    %274 = vector.extract_strided_slice %273 {offsets = [0, 0], sizes = [8, 64], strides = [1, 1]} : vector<8x192xf32> to vector<8x64xf32>
    %275 = vector.extract_strided_slice %273 {offsets = [0, 64], sizes = [8, 64], strides = [1, 1]} : vector<8x192xf32> to vector<8x64xf32>
    %276 = vector.extract_strided_slice %273 {offsets = [0, 128], sizes = [8, 64], strides = [1, 1]} : vector<8x192xf32> to vector<8x64xf32>
    %277 = vector.extract_strided_slice %267 {offsets = [0, 192], sizes = [8, 64], strides = [1, 1]} : vector<8x256xf32> to vector<8x64xf32>
    %278 = math.tanh %277 : vector<8x64xf32>
    %279 = arith.mulf %275, %256 : vector<8x64xf32>
    %280 = arith.mulf %274, %278 : vector<8x64xf32>
    %281 = arith.addf %279, %280 : vector<8x64xf32>
    %282 = math.tanh %281 : vector<8x64xf32>
    %283 = arith.mulf %276, %282 : vector<8x64xf32>
    %cst_46 = arith.constant 0.000000e+00 : f32
    %284 = vector.broadcast %cst_46 : f32 to vector<8x64xf32>
    %285 = arith.select %46, %283, %284 : vector<8x64xi1>, vector<8x64xf32>
    %286 = vector.extract_strided_slice %285 {offsets = [0, 0], sizes = [8, 32], strides = [1, 1]} : vector<8x64xf32> to vector<8x32xf32>
    %287 = vector.extract_strided_slice %285 {offsets = [0, 32], sizes = [8, 32], strides = [1, 1]} : vector<8x64xf32> to vector<8x32xf32>
    %288 = tpu.concatenate %92, %287 in 1 : vector<8x32xf32>, vector<8x32xf32> -> vector<8x64xf32>
    %289 = tpu.concatenate %120, %261 in 1 : vector<8x32xf32>, vector<8x32xf32> -> vector<8x64xf32>
    %290 = tpu.concatenate %148, %233 in 1 : vector<8x32xf32>, vector<8x32xf32> -> vector<8x64xf32>
    %291 = tpu.concatenate %176, %205 in 1 : vector<8x32xf32>, vector<8x32xf32> -> vector<8x64xf32>
    %292 = tpu.concatenate %204, %177 in 1 : vector<8x32xf32>, vector<8x32xf32> -> vector<8x64xf32>
    %293 = tpu.concatenate %232, %149 in 1 : vector<8x32xf32>, vector<8x32xf32> -> vector<8x64xf32>
    %294 = tpu.concatenate %260, %121 in 1 : vector<8x32xf32>, vector<8x32xf32> -> vector<8x64xf32>
    %295 = tpu.concatenate %286, %93 in 1 : vector<8x32xf32>, vector<8x32xf32> -> vector<8x64xf32>
    %296 = tpu.concatenate %288, %289, %290, %291, %292, %293, %294, %295 in 0 : vector<8x64xf32>, vector<8x64xf32>, vector<8x64xf32>, vector<8x64xf32>, vector<8x64xf32>, vector<8x64xf32>, vector<8x64xf32>, vector<8x64xf32> -> vector<64x64xf32>
    %297 = arith.truncf %296 : vector<64x64xf32> to vector<64x64xbf16>
    %c0_47 = arith.constant 0 : index
    %c0_48 = arith.constant 0 : index
    %298 = vector.load %arg7[%c0_47, %c0_48] : memref<64x256xbf16, #tpu.memory_space<vmem>>, vector<64x256xbf16>
    %cst_49 = arith.constant dense<0.000000e+00> : vector<64x256xf32>
    %299 = tpu.matmul %297, %298, %cst_49 {dimension_numbers = #tpu.dot_dimension_numbers<[1], [0], [0], [1], [0, 0, 1, 1], [], []>} : vector<64x64xbf16>, vector<64x256xbf16>, vector<64x256xf32> -> vector<64x256xf32>
    %c0_50 = arith.constant 0 : index
    %c0_51 = arith.constant 0 : index
    %300 = vector.load %arg9[%c0_50, %c0_51] : memref<1x256xf32, #tpu.memory_space<vmem>>, vector<1x256xf32>
    %301 = vector.broadcast %300 : vector<1x256xf32> to vector<64x256xf32>
    %302 = arith.addf %299, %301 : vector<64x256xf32>
    %c0_52 = arith.constant 0 : index
    %c0_53 = arith.constant 0 : index
    %303 = vector.load %arg8[%c0_52, %c0_53] : memref<64x256xbf16, #tpu.memory_space<vmem>>, vector<64x256xbf16>
    %cst_54 = arith.constant 0.000000e+00 : f32
    %304 = vector.broadcast %cst_54 : f32 to vector<8x64xf32>
    %cst_55 = arith.constant 0.000000e+00 : f32
    %305 = vector.broadcast %cst_55 : f32 to vector<8x64xf32>
    %306 = vector.extract_strided_slice %302 {offsets = [0, 0], sizes = [8, 256], strides = [1, 1]} : vector<64x256xf32> to vector<8x256xf32>
    %307 = vector.extract_strided_slice %302 {offsets = [56, 0], sizes = [8, 256], strides = [1, 1]} : vector<64x256xf32> to vector<8x256xf32>
    %308 = arith.select %6, %307, %306 : vector<8x256xi1>, vector<8x256xf32>
    %309 = arith.truncf %304 : vector<8x64xf32> to vector<8x64xbf16>
    %cst_56 = arith.constant dense<0.000000e+00> : vector<8x256xf32>
    %310 = tpu.matmul %309, %303, %cst_56 {dimension_numbers = #tpu.dot_dimension_numbers<[1], [0], [0], [1], [0, 0, 1, 1], [], []>} : vector<8x64xbf16>, vector<64x256xbf16>, vector<8x256xf32> -> vector<8x256xf32>
    %311 = arith.addf %308, %310 : vector<8x256xf32>
    %312 = vector.extract_strided_slice %311 {offsets = [0, 0], sizes = [8, 192], strides = [1, 1]} : vector<8x256xf32> to vector<8x192xf32>
    %313 = arith.negf %312 : vector<8x192xf32>
    %314 = math.exp %313 : vector<8x192xf32>
    %cst_57 = arith.constant 1.000000e+00 : f32
    %315 = vector.broadcast %cst_57 : f32 to vector<8x192xf32>
    %316 = arith.addf %315, %314 : vector<8x192xf32>
    %317 = arith.divf %315, %316 : vector<8x192xf32>
    %318 = vector.extract_strided_slice %317 {offsets = [0, 0], sizes = [8, 64], strides = [1, 1]} : vector<8x192xf32> to vector<8x64xf32>
    %319 = vector.extract_strided_slice %317 {offsets = [0, 64], sizes = [8, 64], strides = [1, 1]} : vector<8x192xf32> to vector<8x64xf32>
    %320 = vector.extract_strided_slice %317 {offsets = [0, 128], sizes = [8, 64], strides = [1, 1]} : vector<8x192xf32> to vector<8x64xf32>
    %321 = vector.extract_strided_slice %311 {offsets = [0, 192], sizes = [8, 64], strides = [1, 1]} : vector<8x256xf32> to vector<8x64xf32>
    %322 = math.tanh %321 : vector<8x64xf32>
    %323 = arith.mulf %319, %305 : vector<8x64xf32>
    %324 = arith.mulf %318, %322 : vector<8x64xf32>
    %325 = arith.addf %323, %324 : vector<8x64xf32>
    %326 = math.tanh %325 : vector<8x64xf32>
    %327 = arith.mulf %320, %326 : vector<8x64xf32>
    %328 = arith.select %11, %325, %305 : vector<8x64xi1>, vector<8x64xf32>
    %329 = arith.select %11, %327, %304 : vector<8x64xi1>, vector<8x64xf32>
    %330 = vector.extract_strided_slice %302 {offsets = [8, 0], sizes = [8, 256], strides = [1, 1]} : vector<64x256xf32> to vector<8x256xf32>
    %331 = vector.extract_strided_slice %302 {offsets = [48, 0], sizes = [8, 256], strides = [1, 1]} : vector<64x256xf32> to vector<8x256xf32>
    %332 = arith.select %6, %331, %330 : vector<8x256xi1>, vector<8x256xf32>
    %333 = arith.truncf %329 : vector<8x64xf32> to vector<8x64xbf16>
    %cst_58 = arith.constant dense<0.000000e+00> : vector<8x256xf32>
    %334 = tpu.matmul %333, %303, %cst_58 {dimension_numbers = #tpu.dot_dimension_numbers<[1], [0], [0], [1], [0, 0, 1, 1], [], []>} : vector<8x64xbf16>, vector<64x256xbf16>, vector<8x256xf32> -> vector<8x256xf32>
    %335 = arith.addf %332, %334 : vector<8x256xf32>
    %336 = vector.extract_strided_slice %335 {offsets = [0, 0], sizes = [8, 192], strides = [1, 1]} : vector<8x256xf32> to vector<8x192xf32>
    %337 = arith.negf %336 : vector<8x192xf32>
    %338 = math.exp %337 : vector<8x192xf32>
    %cst_59 = arith.constant 1.000000e+00 : f32
    %339 = vector.broadcast %cst_59 : f32 to vector<8x192xf32>
    %340 = arith.addf %339, %338 : vector<8x192xf32>
    %341 = arith.divf %339, %340 : vector<8x192xf32>
    %342 = vector.extract_strided_slice %341 {offsets = [0, 0], sizes = [8, 64], strides = [1, 1]} : vector<8x192xf32> to vector<8x64xf32>
    %343 = vector.extract_strided_slice %341 {offsets = [0, 64], sizes = [8, 64], strides = [1, 1]} : vector<8x192xf32> to vector<8x64xf32>
    %344 = vector.extract_strided_slice %341 {offsets = [0, 128], sizes = [8, 64], strides = [1, 1]} : vector<8x192xf32> to vector<8x64xf32>
    %345 = vector.extract_strided_slice %335 {offsets = [0, 192], sizes = [8, 64], strides = [1, 1]} : vector<8x256xf32> to vector<8x64xf32>
    %346 = math.tanh %345 : vector<8x64xf32>
    %347 = arith.mulf %343, %328 : vector<8x64xf32>
    %348 = arith.mulf %342, %346 : vector<8x64xf32>
    %349 = arith.addf %347, %348 : vector<8x64xf32>
    %350 = math.tanh %349 : vector<8x64xf32>
    %351 = arith.mulf %344, %350 : vector<8x64xf32>
    %352 = arith.select %16, %349, %328 : vector<8x64xi1>, vector<8x64xf32>
    %353 = arith.select %16, %351, %329 : vector<8x64xi1>, vector<8x64xf32>
    %354 = vector.extract_strided_slice %302 {offsets = [16, 0], sizes = [8, 256], strides = [1, 1]} : vector<64x256xf32> to vector<8x256xf32>
    %355 = vector.extract_strided_slice %302 {offsets = [40, 0], sizes = [8, 256], strides = [1, 1]} : vector<64x256xf32> to vector<8x256xf32>
    %356 = arith.select %6, %355, %354 : vector<8x256xi1>, vector<8x256xf32>
    %357 = arith.truncf %353 : vector<8x64xf32> to vector<8x64xbf16>
    %cst_60 = arith.constant dense<0.000000e+00> : vector<8x256xf32>
    %358 = tpu.matmul %357, %303, %cst_60 {dimension_numbers = #tpu.dot_dimension_numbers<[1], [0], [0], [1], [0, 0, 1, 1], [], []>} : vector<8x64xbf16>, vector<64x256xbf16>, vector<8x256xf32> -> vector<8x256xf32>
    %359 = arith.addf %356, %358 : vector<8x256xf32>
    %360 = vector.extract_strided_slice %359 {offsets = [0, 0], sizes = [8, 192], strides = [1, 1]} : vector<8x256xf32> to vector<8x192xf32>
    %361 = arith.negf %360 : vector<8x192xf32>
    %362 = math.exp %361 : vector<8x192xf32>
    %cst_61 = arith.constant 1.000000e+00 : f32
    %363 = vector.broadcast %cst_61 : f32 to vector<8x192xf32>
    %364 = arith.addf %363, %362 : vector<8x192xf32>
    %365 = arith.divf %363, %364 : vector<8x192xf32>
    %366 = vector.extract_strided_slice %365 {offsets = [0, 0], sizes = [8, 64], strides = [1, 1]} : vector<8x192xf32> to vector<8x64xf32>
    %367 = vector.extract_strided_slice %365 {offsets = [0, 64], sizes = [8, 64], strides = [1, 1]} : vector<8x192xf32> to vector<8x64xf32>
    %368 = vector.extract_strided_slice %365 {offsets = [0, 128], sizes = [8, 64], strides = [1, 1]} : vector<8x192xf32> to vector<8x64xf32>
    %369 = vector.extract_strided_slice %359 {offsets = [0, 192], sizes = [8, 64], strides = [1, 1]} : vector<8x256xf32> to vector<8x64xf32>
    %370 = math.tanh %369 : vector<8x64xf32>
    %371 = arith.mulf %367, %352 : vector<8x64xf32>
    %372 = arith.mulf %366, %370 : vector<8x64xf32>
    %373 = arith.addf %371, %372 : vector<8x64xf32>
    %374 = math.tanh %373 : vector<8x64xf32>
    %375 = arith.mulf %368, %374 : vector<8x64xf32>
    %376 = arith.select %21, %373, %352 : vector<8x64xi1>, vector<8x64xf32>
    %377 = arith.select %21, %375, %353 : vector<8x64xi1>, vector<8x64xf32>
    %378 = vector.extract_strided_slice %302 {offsets = [24, 0], sizes = [8, 256], strides = [1, 1]} : vector<64x256xf32> to vector<8x256xf32>
    %379 = vector.extract_strided_slice %302 {offsets = [32, 0], sizes = [8, 256], strides = [1, 1]} : vector<64x256xf32> to vector<8x256xf32>
    %380 = arith.select %6, %379, %378 : vector<8x256xi1>, vector<8x256xf32>
    %381 = arith.truncf %377 : vector<8x64xf32> to vector<8x64xbf16>
    %cst_62 = arith.constant dense<0.000000e+00> : vector<8x256xf32>
    %382 = tpu.matmul %381, %303, %cst_62 {dimension_numbers = #tpu.dot_dimension_numbers<[1], [0], [0], [1], [0, 0, 1, 1], [], []>} : vector<8x64xbf16>, vector<64x256xbf16>, vector<8x256xf32> -> vector<8x256xf32>
    %383 = arith.addf %380, %382 : vector<8x256xf32>
    %384 = vector.extract_strided_slice %383 {offsets = [0, 0], sizes = [8, 192], strides = [1, 1]} : vector<8x256xf32> to vector<8x192xf32>
    %385 = arith.negf %384 : vector<8x192xf32>
    %386 = math.exp %385 : vector<8x192xf32>
    %cst_63 = arith.constant 1.000000e+00 : f32
    %387 = vector.broadcast %cst_63 : f32 to vector<8x192xf32>
    %388 = arith.addf %387, %386 : vector<8x192xf32>
    %389 = arith.divf %387, %388 : vector<8x192xf32>
    %390 = vector.extract_strided_slice %389 {offsets = [0, 0], sizes = [8, 64], strides = [1, 1]} : vector<8x192xf32> to vector<8x64xf32>
    %391 = vector.extract_strided_slice %389 {offsets = [0, 64], sizes = [8, 64], strides = [1, 1]} : vector<8x192xf32> to vector<8x64xf32>
    %392 = vector.extract_strided_slice %389 {offsets = [0, 128], sizes = [8, 64], strides = [1, 1]} : vector<8x192xf32> to vector<8x64xf32>
    %393 = vector.extract_strided_slice %383 {offsets = [0, 192], sizes = [8, 64], strides = [1, 1]} : vector<8x256xf32> to vector<8x64xf32>
    %394 = math.tanh %393 : vector<8x64xf32>
    %395 = arith.mulf %391, %376 : vector<8x64xf32>
    %396 = arith.mulf %390, %394 : vector<8x64xf32>
    %397 = arith.addf %395, %396 : vector<8x64xf32>
    %398 = math.tanh %397 : vector<8x64xf32>
    %399 = arith.mulf %392, %398 : vector<8x64xf32>
    %400 = arith.select %26, %397, %376 : vector<8x64xi1>, vector<8x64xf32>
    %401 = arith.select %26, %399, %377 : vector<8x64xi1>, vector<8x64xf32>
    %402 = vector.extract_strided_slice %302 {offsets = [32, 0], sizes = [8, 256], strides = [1, 1]} : vector<64x256xf32> to vector<8x256xf32>
    %403 = vector.extract_strided_slice %302 {offsets = [24, 0], sizes = [8, 256], strides = [1, 1]} : vector<64x256xf32> to vector<8x256xf32>
    %404 = arith.select %6, %403, %402 : vector<8x256xi1>, vector<8x256xf32>
    %405 = arith.truncf %401 : vector<8x64xf32> to vector<8x64xbf16>
    %cst_64 = arith.constant dense<0.000000e+00> : vector<8x256xf32>
    %406 = tpu.matmul %405, %303, %cst_64 {dimension_numbers = #tpu.dot_dimension_numbers<[1], [0], [0], [1], [0, 0, 1, 1], [], []>} : vector<8x64xbf16>, vector<64x256xbf16>, vector<8x256xf32> -> vector<8x256xf32>
    %407 = arith.addf %404, %406 : vector<8x256xf32>
    %408 = vector.extract_strided_slice %407 {offsets = [0, 0], sizes = [8, 192], strides = [1, 1]} : vector<8x256xf32> to vector<8x192xf32>
    %409 = arith.negf %408 : vector<8x192xf32>
    %410 = math.exp %409 : vector<8x192xf32>
    %cst_65 = arith.constant 1.000000e+00 : f32
    %411 = vector.broadcast %cst_65 : f32 to vector<8x192xf32>
    %412 = arith.addf %411, %410 : vector<8x192xf32>
    %413 = arith.divf %411, %412 : vector<8x192xf32>
    %414 = vector.extract_strided_slice %413 {offsets = [0, 0], sizes = [8, 64], strides = [1, 1]} : vector<8x192xf32> to vector<8x64xf32>
    %415 = vector.extract_strided_slice %413 {offsets = [0, 64], sizes = [8, 64], strides = [1, 1]} : vector<8x192xf32> to vector<8x64xf32>
    %416 = vector.extract_strided_slice %413 {offsets = [0, 128], sizes = [8, 64], strides = [1, 1]} : vector<8x192xf32> to vector<8x64xf32>
    %417 = vector.extract_strided_slice %407 {offsets = [0, 192], sizes = [8, 64], strides = [1, 1]} : vector<8x256xf32> to vector<8x64xf32>
    %418 = math.tanh %417 : vector<8x64xf32>
    %419 = arith.mulf %415, %400 : vector<8x64xf32>
    %420 = arith.mulf %414, %418 : vector<8x64xf32>
    %421 = arith.addf %419, %420 : vector<8x64xf32>
    %422 = math.tanh %421 : vector<8x64xf32>
    %423 = arith.mulf %416, %422 : vector<8x64xf32>
    %424 = arith.select %31, %421, %400 : vector<8x64xi1>, vector<8x64xf32>
    %425 = arith.select %31, %423, %401 : vector<8x64xi1>, vector<8x64xf32>
    %426 = vector.extract_strided_slice %302 {offsets = [40, 0], sizes = [8, 256], strides = [1, 1]} : vector<64x256xf32> to vector<8x256xf32>
    %427 = vector.extract_strided_slice %302 {offsets = [16, 0], sizes = [8, 256], strides = [1, 1]} : vector<64x256xf32> to vector<8x256xf32>
    %428 = arith.select %6, %427, %426 : vector<8x256xi1>, vector<8x256xf32>
    %429 = arith.truncf %425 : vector<8x64xf32> to vector<8x64xbf16>
    %cst_66 = arith.constant dense<0.000000e+00> : vector<8x256xf32>
    %430 = tpu.matmul %429, %303, %cst_66 {dimension_numbers = #tpu.dot_dimension_numbers<[1], [0], [0], [1], [0, 0, 1, 1], [], []>} : vector<8x64xbf16>, vector<64x256xbf16>, vector<8x256xf32> -> vector<8x256xf32>
    %431 = arith.addf %428, %430 : vector<8x256xf32>
    %432 = vector.extract_strided_slice %431 {offsets = [0, 0], sizes = [8, 192], strides = [1, 1]} : vector<8x256xf32> to vector<8x192xf32>
    %433 = arith.negf %432 : vector<8x192xf32>
    %434 = math.exp %433 : vector<8x192xf32>
    %cst_67 = arith.constant 1.000000e+00 : f32
    %435 = vector.broadcast %cst_67 : f32 to vector<8x192xf32>
    %436 = arith.addf %435, %434 : vector<8x192xf32>
    %437 = arith.divf %435, %436 : vector<8x192xf32>
    %438 = vector.extract_strided_slice %437 {offsets = [0, 0], sizes = [8, 64], strides = [1, 1]} : vector<8x192xf32> to vector<8x64xf32>
    %439 = vector.extract_strided_slice %437 {offsets = [0, 64], sizes = [8, 64], strides = [1, 1]} : vector<8x192xf32> to vector<8x64xf32>
    %440 = vector.extract_strided_slice %437 {offsets = [0, 128], sizes = [8, 64], strides = [1, 1]} : vector<8x192xf32> to vector<8x64xf32>
    %441 = vector.extract_strided_slice %431 {offsets = [0, 192], sizes = [8, 64], strides = [1, 1]} : vector<8x256xf32> to vector<8x64xf32>
    %442 = math.tanh %441 : vector<8x64xf32>
    %443 = arith.mulf %439, %424 : vector<8x64xf32>
    %444 = arith.mulf %438, %442 : vector<8x64xf32>
    %445 = arith.addf %443, %444 : vector<8x64xf32>
    %446 = math.tanh %445 : vector<8x64xf32>
    %447 = arith.mulf %440, %446 : vector<8x64xf32>
    %448 = arith.select %36, %445, %424 : vector<8x64xi1>, vector<8x64xf32>
    %449 = arith.select %36, %447, %425 : vector<8x64xi1>, vector<8x64xf32>
    %450 = vector.extract_strided_slice %302 {offsets = [48, 0], sizes = [8, 256], strides = [1, 1]} : vector<64x256xf32> to vector<8x256xf32>
    %451 = vector.extract_strided_slice %302 {offsets = [8, 0], sizes = [8, 256], strides = [1, 1]} : vector<64x256xf32> to vector<8x256xf32>
    %452 = arith.select %6, %451, %450 : vector<8x256xi1>, vector<8x256xf32>
    %453 = arith.truncf %449 : vector<8x64xf32> to vector<8x64xbf16>
    %cst_68 = arith.constant dense<0.000000e+00> : vector<8x256xf32>
    %454 = tpu.matmul %453, %303, %cst_68 {dimension_numbers = #tpu.dot_dimension_numbers<[1], [0], [0], [1], [0, 0, 1, 1], [], []>} : vector<8x64xbf16>, vector<64x256xbf16>, vector<8x256xf32> -> vector<8x256xf32>
    %455 = arith.addf %452, %454 : vector<8x256xf32>
    %456 = vector.extract_strided_slice %455 {offsets = [0, 0], sizes = [8, 192], strides = [1, 1]} : vector<8x256xf32> to vector<8x192xf32>
    %457 = arith.negf %456 : vector<8x192xf32>
    %458 = math.exp %457 : vector<8x192xf32>
    %cst_69 = arith.constant 1.000000e+00 : f32
    %459 = vector.broadcast %cst_69 : f32 to vector<8x192xf32>
    %460 = arith.addf %459, %458 : vector<8x192xf32>
    %461 = arith.divf %459, %460 : vector<8x192xf32>
    %462 = vector.extract_strided_slice %461 {offsets = [0, 0], sizes = [8, 64], strides = [1, 1]} : vector<8x192xf32> to vector<8x64xf32>
    %463 = vector.extract_strided_slice %461 {offsets = [0, 64], sizes = [8, 64], strides = [1, 1]} : vector<8x192xf32> to vector<8x64xf32>
    %464 = vector.extract_strided_slice %461 {offsets = [0, 128], sizes = [8, 64], strides = [1, 1]} : vector<8x192xf32> to vector<8x64xf32>
    %465 = vector.extract_strided_slice %455 {offsets = [0, 192], sizes = [8, 64], strides = [1, 1]} : vector<8x256xf32> to vector<8x64xf32>
    %466 = math.tanh %465 : vector<8x64xf32>
    %467 = arith.mulf %463, %448 : vector<8x64xf32>
    %468 = arith.mulf %462, %466 : vector<8x64xf32>
    %469 = arith.addf %467, %468 : vector<8x64xf32>
    %470 = math.tanh %469 : vector<8x64xf32>
    %471 = arith.mulf %464, %470 : vector<8x64xf32>
    %472 = arith.select %41, %469, %448 : vector<8x64xi1>, vector<8x64xf32>
    %473 = arith.select %41, %471, %449 : vector<8x64xi1>, vector<8x64xf32>
    %474 = vector.extract_strided_slice %302 {offsets = [56, 0], sizes = [8, 256], strides = [1, 1]} : vector<64x256xf32> to vector<8x256xf32>
    %475 = vector.extract_strided_slice %302 {offsets = [0, 0], sizes = [8, 256], strides = [1, 1]} : vector<64x256xf32> to vector<8x256xf32>
    %476 = arith.select %6, %475, %474 : vector<8x256xi1>, vector<8x256xf32>
    %477 = arith.truncf %473 : vector<8x64xf32> to vector<8x64xbf16>
    %cst_70 = arith.constant dense<0.000000e+00> : vector<8x256xf32>
    %478 = tpu.matmul %477, %303, %cst_70 {dimension_numbers = #tpu.dot_dimension_numbers<[1], [0], [0], [1], [0, 0, 1, 1], [], []>} : vector<8x64xbf16>, vector<64x256xbf16>, vector<8x256xf32> -> vector<8x256xf32>
    %479 = arith.addf %476, %478 : vector<8x256xf32>
    %480 = vector.extract_strided_slice %479 {offsets = [0, 0], sizes = [8, 192], strides = [1, 1]} : vector<8x256xf32> to vector<8x192xf32>
    %481 = arith.negf %480 : vector<8x192xf32>
    %482 = math.exp %481 : vector<8x192xf32>
    %cst_71 = arith.constant 1.000000e+00 : f32
    %483 = vector.broadcast %cst_71 : f32 to vector<8x192xf32>
    %484 = arith.addf %483, %482 : vector<8x192xf32>
    %485 = arith.divf %483, %484 : vector<8x192xf32>
    %486 = vector.extract_strided_slice %485 {offsets = [0, 0], sizes = [8, 64], strides = [1, 1]} : vector<8x192xf32> to vector<8x64xf32>
    %487 = vector.extract_strided_slice %485 {offsets = [0, 64], sizes = [8, 64], strides = [1, 1]} : vector<8x192xf32> to vector<8x64xf32>
    %488 = vector.extract_strided_slice %485 {offsets = [0, 128], sizes = [8, 64], strides = [1, 1]} : vector<8x192xf32> to vector<8x64xf32>
    %489 = vector.extract_strided_slice %479 {offsets = [0, 192], sizes = [8, 64], strides = [1, 1]} : vector<8x256xf32> to vector<8x64xf32>
    %490 = math.tanh %489 : vector<8x64xf32>
    %491 = arith.mulf %487, %472 : vector<8x64xf32>
    %492 = arith.mulf %486, %490 : vector<8x64xf32>
    %493 = arith.addf %491, %492 : vector<8x64xf32>
    %494 = math.tanh %493 : vector<8x64xf32>
    %495 = arith.mulf %488, %494 : vector<8x64xf32>
    %496 = arith.select %46, %495, %473 : vector<8x64xi1>, vector<8x64xf32>
    %c0_72 = arith.constant 0 : index
    %c0_73 = arith.constant 0 : index
    %497 = vector.load %arg10[%c0_72, %c0_73] : memref<64x128xf32, #tpu.memory_space<vmem>>, vector<64x128xf32>
    %cst_74 = arith.constant dense<0.000000e+00> : vector<8x128xf32>
    %498 = tpu.matmul %496, %497, %cst_74 {dimension_numbers = #tpu.dot_dimension_numbers<[1], [0], [0], [1], [0, 0, 1, 1], [], []>} : vector<8x64xf32>, vector<64x128xf32>, vector<8x128xf32> -> vector<8x128xf32>
    %c0_75 = arith.constant 0 : index
    %c0_76 = arith.constant 0 : index
    %499 = vector.load %arg11[%c0_75, %c0_76] : memref<1x128xf32, #tpu.memory_space<vmem>>, vector<1x128xf32>
    %500 = vector.broadcast %499 : vector<1x128xf32> to vector<8x128xf32>
    %501 = arith.addf %498, %500 : vector<8x128xf32>
    %c0_77 = arith.constant 0 : index
    %c0_78 = arith.constant 0 : index
    %502 = vector.load %arg12[%c0_77, %c0_78] : memref<8x128xf32, #tpu.memory_space<vmem>>, vector<8x128xf32>
    tpu.vector_store %arg12[%c0_77, %c0_78], %501 {strides = array<i32>} : memref<8x128xf32, #tpu.memory_space<vmem>>, vector<8x128xf32>,
    return
  }
  func.func @transform_0(%arg0: i32) -> (i32, i32) {
    %c0_i32 = arith.constant 0 : i32
    %c0_i32_0 = arith.constant 0 : i32
    %c0_i32_1 = arith.constant 0 : i32
    return %c0_i32, %c0_i32_0 : i32, i32
  }
  func.func @transform_1(%arg0: i32) -> (i32, i32) {
    %c0_i32 = arith.constant 0 : i32
    %c0_i32_0 = arith.constant 0 : i32
    %c0_i32_1 = arith.constant 0 : i32
    return %c0_i32, %c0_i32_0 : i32, i32
  }
  func.func @transform_2(%arg0: i32) -> (i32, i32) {
    %c0_i32 = arith.constant 0 : i32
    %c0_i32_0 = arith.constant 0 : i32
    %c0_i32_1 = arith.constant 0 : i32
    return %c0_i32, %c0_i32_0 : i32, i32
  }
  func.func @transform_3(%arg0: i32) -> (i32, i32) {
    %c0_i32 = arith.constant 0 : i32
    %c0_i32_0 = arith.constant 0 : i32
    %c0_i32_1 = arith.constant 0 : i32
    return %c0_i32, %c0_i32_0 : i32, i32
  }
  func.func @transform_4(%arg0: i32) -> (i32, i32) {
    %c0_i32 = arith.constant 0 : i32
    %c0_i32_0 = arith.constant 0 : i32
    %c0_i32_1 = arith.constant 0 : i32
    return %c0_i32, %c0_i32_0 : i32, i32
  }
  func.func @transform_5(%arg0: i32) -> (i32, i32) {
    %c0_i32 = arith.constant 0 : i32
    %c0_i32_0 = arith.constant 0 : i32
    %c0_i32_1 = arith.constant 0 : i32
    return %c0_i32, %c0_i32_0 : i32, i32
  }
  func.func @transform_6(%arg0: i32) -> (i32, i32) {
    %c0_i32 = arith.constant 0 : i32
    %c0_i32_0 = arith.constant 0 : i32
    %c0_i32_1 = arith.constant 0 : i32
    return %c0_i32, %c0_i32_0 : i32, i32
  }
  func.func @transform_7(%arg0: i32) -> (i32, i32) {
    %c0_i32 = arith.constant 0 : i32
    %c0_i32_0 = arith.constant 0 : i32
    %c0_i32_1 = arith.constant 0 : i32
    return %c0_i32, %c0_i32_0 : i32, i32
  }
  func.func @transform_8(%arg0: i32) -> (i32, i32) {
    %c0_i32 = arith.constant 0 : i32
    %c0_i32_0 = arith.constant 0 : i32
    %c0_i32_1 = arith.constant 0 : i32
    return %c0_i32, %c0_i32_0 : i32, i32
  }
  func.func @transform_9(%arg0: i32) -> (i32, i32) {
    %c0_i32 = arith.constant 0 : i32
    %c0_i32_0 = arith.constant 0 : i32
    %c0_i32_1 = arith.constant 0 : i32
    return %c0_i32, %c0_i32_0 : i32, i32
  }
  func.func @transform_10(%arg0: i32) -> (i32, i32) {
    %c0_i32 = arith.constant 0 : i32
    %c0_i32_0 = arith.constant 0 : i32
    %c0_i32_1 = arith.constant 0 : i32
    return %c0_i32, %c0_i32_0 : i32, i32
  }
  func.func @transform_11(%arg0: i32) -> (i32, i32) {
    %c0_i32 = arith.constant 0 : i32
    %c0_i32_0 = arith.constant 0 : i32
    %c0_i32_1 = arith.constant 0 : i32
    return %c0_i32, %c0_i32_0 : i32, i32
  }
}

</mosaic_0001>

<llo_original>
// kernel: tpu_custom_call.1
$region0: #{tpu_custom_call.1}
  #allocation0 [shape = 'u32[]', space=smem, size = 0x4, offset = 0x4, fixed_abs, tag = 'smem constant byte address 0x4 - core index']
  #allocation1 [shape = 'u32[144,128]{1,0:T(1,128)}', space=vmem, size = 0x12000, scoped, tag = 'internal scratch']
  %s0 = inlined_call_operand.vmem [shape: s32[8,1], index: 0, kind: input, shape index: {}]
  %s1 = inlined_call_operand.vmem [shape: s32[64,1], index: 1, kind: input, shape index: {}]
  %s2 = inlined_call_operand.vmem [shape: f32[50,16], index: 2, kind: input, shape index: {}]
  %s3 = inlined_call_operand.vmem [shape: bf16[16,256], index: 3, kind: input, shape index: {}]
  %s4 = inlined_call_operand.vmem [shape: bf16[64,256], index: 4, kind: input, shape index: {}]
  %s5 = inlined_call_operand.vmem [shape: f32[1,256], index: 5, kind: input, shape index: {}]
  %s6 = inlined_call_operand.vmem [shape: bf16[64,256], index: 6, kind: input, shape index: {}]
  %s7 = inlined_call_operand.hbm [shape: bf16[64,256], index: 7, kind: input, shape index: {}]
  %s8 = inlined_call_operand.vmem [shape: f32[1,256], index: 8, kind: input, shape index: {}]
  %s9 = inlined_call_operand.hbm [shape: f32[64,128], index: 9, kind: input, shape index: {}]
  %s10 = inlined_call_operand.vmem [shape: f32[1,128], index: 10, kind: input, shape index: {}]
  %s11 = inlined_call_operand.hbm [shape: f32[8,128], index: 11, kind: output, shape index: {}]
  %s12 = sld [smem:[#allocation0]]
  $region62: #{tpu_custom_call.1} parent=0
    _
  %s14 = ssub.s32 1, %s12
  %s15 = scalar_select 0, %s14, %s12
  $region1: #{tpu_custom_call.1} parent=0
    #allocation2 [shape = 'u8[32768]{0}', space=vmem, size = 0x8000, scoped, tag = 'input window, operand 7, single buffered']
    #allocation3 [shape = 's32[1]{0}', space=sflag, size = 0x4, scoped, tag = 'scoped memory for tpu_custom_call.1']
    #allocation4 [shape = 's32[1]{0}', space=sflag, size = 0x4, scoped, tag = 'scoped memory for tpu_custom_call.1']
    #allocation5 [shape = 'u8[32768]{0}', space=vmem, size = 0x8000, scoped, tag = 'input window, operand 9, single buffered']
    #allocation6 [shape = 's32[1]{0}', space=sflag, size = 0x4, scoped, tag = 'scoped memory for tpu_custom_call.1']
    #allocation7 [shape = 'u8[4096]{0}', space=vmem, size = 0x1000, scoped, tag = 'output window, operand 0, single buffered']
    %16 = vsyncpa [#allocation3], 0
    %17 = vsyncpa [#allocation6], 0
    %18 = vsyncpa [#allocation4], 0
    // Predicated region
    $region2: #{tpu_custom_call.1} parent=1 // pred_check
      _
    $region3: #{tpu_custom_call.1} parent=1 // pred_check_branch
      %20 = sbr.rel (0) target = $region5
    $region4: #{tpu_custom_call.1} parent=1 // pred_region
      _
    $region5: #{tpu_custom_call.1} parent=1 // pred_fallthru
      _
    // Predicated region
    $region6: #{tpu_custom_call.1} parent=1 // pred_check
      _
    $region7: #{tpu_custom_call.1} parent=1 // pred_check_branch
      %22 = sbr.rel (0) target = $region9
    $region8: #{tpu_custom_call.1} parent=1 // pred_region
      _
    $region9: #{tpu_custom_call.1} parent=1 // pred_fallthru
      _
    // Predicated region
    $region10: #{tpu_custom_call.1} parent=1 // pred_check
      _
    $region11: #{tpu_custom_call.1} parent=1 // pred_check_branch
      %24 = sbr.rel (0) target = $region13
    $region12: #{tpu_custom_call.1} parent=1 // pred_region
      _
    $region13: #{tpu_custom_call.1} parent=1 // pred_fallthru
      _
    // Predicated region
    $region14: #{tpu_custom_call.1} parent=1 // pred_check
      _
    $region15: #{tpu_custom_call.1} parent=1 // pred_check_branch
      %26 = sbr.rel (0) target = $region17
    $region16: #{tpu_custom_call.1} parent=1 // pred_region
      _
    $region17: #{tpu_custom_call.1} parent=1 // pred_fallthru
      _
    // Predicated region
    $region18: #{tpu_custom_call.1} parent=1 // pred_check
      _
    $region19: #{tpu_custom_call.1} parent=1 // pred_check_branch
      %28 = sbr.rel (0) target = $region21
    $region20: #{tpu_custom_call.1} parent=1 // pred_region
      _
    $region21: #{tpu_custom_call.1} parent=1 // pred_fallthru
      _
    // Predicated region
    $region22: #{tpu_custom_call.1} parent=1 // pred_check
      _
    $region23: #{tpu_custom_call.1} parent=1 // pred_check_branch
      %30 = sbr.rel (0) target = $region25
    $region24: #{tpu_custom_call.1} parent=1 // pred_region
      _
    $region25: #{tpu_custom_call.1} parent=1 // pred_fallthru
      _
    // Predicated region
    $region26: #{tpu_custom_call.1} parent=1 // pred_check
      _
    $region27: #{tpu_custom_call.1} parent=1 // pred_check_branch
      %32 = sbr.rel (0) target = $region29
    $region28: #{tpu_custom_call.1} parent=1 // pred_region
      _
    $region29: #{tpu_custom_call.1} parent=1 // pred_fallthru
      _
    // Predicated region
    $region30: #{tpu_custom_call.1} parent=1 // pred_check
      _
    $region31: #{tpu_custom_call.1} parent=1 // pred_check_branch
      %34 = sbr.rel (0) target = $region33
    $region32: #{tpu_custom_call.1} parent=1 // pred_region
      %s36 = ssub.s32 1024, 1024
      %37 = vsyncadd [#allocation3], %s36
      %s38 = sshll.u32 [#allocation2], 4
      %s39 = int_to_ptr.vmem [resolvable:$true] %s38
      %44 = dma.hbm_to_vmem [thread:$0]  %s7, 1024, %s39, [#allocation3], 128, 128, 8
    $region33: #{tpu_custom_call.1} parent=1 // pred_fallthru
      _
    // Predicated region
    $region34: #{tpu_custom_call.1} parent=1 // pred_check
      _
    $region35: #{tpu_custom_call.1} parent=1 // pred_check_branch
      %46 = sbr.rel (0) target = $region37
    $region36: #{tpu_custom_call.1} parent=1 // pred_region
      _
    $region37: #{tpu_custom_call.1} parent=1 // pred_fallthru
      _
    // Predicated region
    $region38: #{tpu_custom_call.1} parent=1 // pred_check
      _
    $region39: #{tpu_custom_call.1} parent=1 // pred_check_branch
      %48 = sbr.rel (0) target = $region41
    $region40: #{tpu_custom_call.1} parent=1 // pred_region
      %s50 = ssub.s32 1024, 1024
      %51 = vsyncadd [#allocation6], %s50
      %s52 = sshll.u32 [#allocation5], 4
      %s53 = int_to_ptr.vmem [resolvable:$true] %s52
      %58 = dma.hbm_to_vmem [thread:$0]  %s9, 1024, %s53, [#allocation6], 128, 128, 8
    $region41: #{tpu_custom_call.1} parent=1 // pred_fallthru
      _
    // Predicated region
    $region42: #{tpu_custom_call.1} parent=1 // pred_check
      _
    $region43: #{tpu_custom_call.1} parent=1 // pred_check_branch
      %60 = sbr.rel (0) target = $region45
    $region44: #{tpu_custom_call.1} parent=1 // pred_region
      _
    $region45: #{tpu_custom_call.1} parent=1 // pred_fallthru
      _
    // Predicated region
    $region46: #{tpu_custom_call.1} parent=1 // pred_check
      _
    $region47: #{tpu_custom_call.1} parent=1 // pred_check_branch
      %62 = sbr.rel (0) target = $region49
    $region48: #{tpu_custom_call.1} parent=1 // pred_region
      %63 = dma.done [#allocation3], 1024
    $region49: #{tpu_custom_call.1} parent=1 // pred_fallthru
      _
    // Predicated region
    $region50: #{tpu_custom_call.1} parent=1 // pred_check
      _
    $region51: #{tpu_custom_call.1} parent=1 // pred_check_branch
      %65 = sbr.rel (0) target = $region53
    $region52: #{tpu_custom_call.1} parent=1 // pred_region
      %66 = dma.done [#allocation6], 1024
    $region53: #{tpu_custom_call.1} parent=1 // pred_fallthru
      _
    %v68 = vld [vmem:[%s0] sm:$0xff]
    %v69 = vlaneseq
    %v70 = vand.u32 %v69, 127
    %vm71 = vcmp.ge.s32.totalorder %v70, 32
    %72 = vrot.lane.b32.xlu0 %v70, 64
    %v73 = vpop.permute.xlu0 %72
    %vm74 = vcmask 523264
    %v75 = vsel %vm74, %v70, %v73
    %vm76 = vcmp.ge.s32.totalorder %v75, 32
    %v77 = vsel %vm71, 7, 0
    %78 = vset.pattern.permute.xlu0 0
    %79 = vperm.xlu0 %78, %v68
    %v80 = vpop.permute.xlu0 %79
    %vm81 = vcmp.lt.s32.totalorder %v77, %v80
    %v82 = vsel %vm71, 6, 1
    %vm83 = vcmp.lt.s32.totalorder %v82, %v80
    %v84 = vsel %vm71, 5, 2
    %vm85 = vcmp.lt.s32.totalorder %v84, %v80
    %v86 = vsel %vm71, 4, 3
    %vm87 = vcmp.lt.s32.totalorder %v86, %v80
    %v88 = vsel %vm71, 3, 4
    %vm89 = vcmp.lt.s32.totalorder %v88, %v80
    %v90 = vsel %vm71, 2, 5
    %vm91 = vcmp.lt.s32.totalorder %v90, %v80
    %v92 = vsel %vm71, 1, 6
    %vm93 = vcmp.lt.s32.totalorder %v92, %v80
    %v94 = vsel %vm71, 0, 7
    %vm95 = vcmp.lt.s32.totalorder %v94, %v80
    %v96 = vld [vmem:[%s1] sm:$0xff]
    %v97 = vld [vmem:[%s1 + $0x8] sm:$0xff]
    %v98 = vld [vmem:[%s1 + $0x10] sm:$0xff]
    %v99 = vld [vmem:[%s1 + $0x18] sm:$0xff]
    %v100 = vld [vmem:[%s1 + $0x20] sm:$0xff]
    %v101 = vld [vmem:[%s1 + $0x28] sm:$0xff]
    %v102 = vld [vmem:[%s1 + $0x30] sm:$0xff]
    %v103 = vld [vmem:[%s1 + $0x38] sm:$0xff]
    %104 = vset.pattern.permute.xlu0 0
    %105 = vperm.xlu0 %104, %v96
    %v106 = vpop.permute.xlu0 %105
    %107 = vset.pattern.permute.xlu0 0
    %108 = vperm.xlu0 %107, %v97
    %v109 = vpop.permute.xlu0 %108
    %110 = vset.pattern.permute.xlu0 0
    %111 = vperm.xlu0 %110, %v98
    %v112 = vpop.permute.xlu0 %111
    %113 = vset.pattern.permute.xlu0 0
    %114 = vperm.xlu0 %113, %v99
    %v115 = vpop.permute.xlu0 %114
    %116 = vset.pattern.permute.xlu0 0
    %117 = vperm.xlu0 %116, %v100
    %v118 = vpop.permute.xlu0 %117
    %119 = vset.pattern.permute.xlu0 0
    %120 = vperm.xlu0 %119, %v101
    %v121 = vpop.permute.xlu0 %120
    %122 = vset.pattern.permute.xlu0 0
    %123 = vperm.xlu0 %122, %v102
    %v124 = vpop.permute.xlu0 %123
    %125 = vset.pattern.permute.xlu0 0
    %126 = vperm.xlu0 %125, %v103
    %v127 = vpop.permute.xlu0 %126
    %vm128 = vcmp.eq.s32.totalorder %v70, %v106
    %vm129 = vcmp.eq.s32.totalorder %v70, %v109
    %vm130 = vcmp.eq.s32.totalorder %v70, %v112
    %vm131 = vcmp.eq.s32.totalorder %v70, %v115
    %vm132 = vcmp.eq.s32.totalorder %v70, %v118
    %vm133 = vcmp.eq.s32.totalorder %v70, %v121
    %vm134 = vcmp.eq.s32.totalorder %v70, %v124
    %vm135 = vcmp.eq.s32.totalorder %v70, %v127
    %v136 = vsel %vm128, 1, 0
    %v137 = vsel %vm129, 1, 0
    %v138 = vsel %vm130, 1, 0
    %v139 = vsel %vm131, 1, 0
    %v140 = vsel %vm132, 1, 0
    %v141 = vsel %vm133, 1, 0
    %v142 = vsel %vm134, 1, 0
    %v143 = vsel %vm135, 1, 0
    %v144 = vcvt.s32.f32 %v136
    %v145 = vcvt.s32.f32 %v137
    %v146 = vcvt.s32.f32 %v138
    %v147 = vcvt.s32.f32 %v139
    %v148 = vcvt.s32.f32 %v140
    %v149 = vcvt.s32.f32 %v141
    %v150 = vcvt.s32.f32 %v142
    %v151 = vcvt.s32.f32 %v143
    %v152 = vpack.c.bf16 %v145, %v144
    %v153 = vpack.c.bf16 %v147, %v146
    %v154 = vpack.c.bf16 %v149, %v148
    %v155 = vpack.c.bf16 %v151, %v150
    %v156 = vld [vmem:[%s2] sm:$0xff]
    %v157 = vld [vmem:[%s2 + $0x8] sm:$0xff]
    %v158 = vld [vmem:[%s2 + $0x10] sm:$0xff]
    %v159 = vld [vmem:[%s2 + $0x18] sm:$0xff]
    %v160 = vld [vmem:[%s2 + $0x20] sm:$0xff]
    %v161 = vld [vmem:[%s2 + $0x28] sm:$0xff]
    %v162 = vld [vmem:[%s2 + $0x30] sm:$0x3]
    %v163 = vpack.c.bf16 %v157, %v156
    %v164 = vpack.c.bf16 %v159, %v158
    %v165 = vpack.c.bf16 %v161, %v160
    %v166 = vpack.c.bf16 %v162, %v162
    %vm167 = vcmask 408576
    %v169 = vsel %vm167, %v152, 0
    %v172 = vsel %vm167, %v153, 0
    %v175 = vsel %vm167, %v154, 0
    %v178 = vsel %vm167, %v155, 0
    %vm180 = vcmask 1040384
    %v182 = vsel %vm180, %v166, 0
    %184 = vmatprep.subr.bf16.mxu0 0
    %185 = vmatpush1.bf16.msra.mxu0 %v163
    %186 = vmatprep.subr.bf16.mxu0 0
    %187 = vmatpush1.bf16.msra.mxu0 %v164
    %188 = vmatprep.subr.bf16.mxu0 0
    %189 = vmatpush1.bf16.msra.mxu0 %v165
    %190 = vmatprep.subr.bf16.mxu0 0
    %191 = vmatpush1.bf16.msra.mxu0 %v182
    %192 = vmatprep.subr.bf16.mxu0 0
    %193 = vmatpush1.bf16.msra.mxu0 0
    %194 = vmatprep.subr.bf16.mxu0 0
    %195 = vmatpush1.bf16.msra.mxu0 0
    %196 = vmatprep.subr.bf16.mxu0 0
    %197 = vmatpush1.bf16.msra.mxu0 0
    %198 = vmatprep.subr.bf16.mxu0 0
    %199 = vmatpush1.bf16.msra.mxu0 0
    %200 = vmatprep.subr.bf16.mxu0 0
    %201 = vmatpush1.bf16.msra.mxu0 0
    %202 = vmatprep.subr.bf16.mxu0 0
    %203 = vmatpush1.bf16.msra.mxu0 0
    %204 = vmatprep.subr.bf16.mxu0 0
    %205 = vmatpush1.bf16.msra.mxu0 0
    %206 = vmatprep.subr.bf16.mxu0 0
    %207 = vmatpush1.bf16.msra.mxu0 0
    %208 = vmatprep.subr.bf16.mxu0 0
    %209 = vmatpush1.bf16.msra.mxu0 0
    %210 = vmatprep.subr.bf16.mxu0 0
    %211 = vmatpush1.bf16.msra.mxu0 0
    %212 = vmatprep.subr.bf16.mxu0 0
    %213 = vmatpush1.bf16.msra.mxu0 0
    %214 = vmatprep.subr.bf16.mxu0 0
    %215 = vmatpush1.bf16.msra.mxu0 0
    %216 = vmatprep.mubr.bf16.mxu0 0
    %217 = vmatmul.mubr.bf16.gmra.mrb[0].mxu0 %v169
    %v218 = vpop.f32.mrb[0].mxu0
    %v219 = vadd.f32 0.0, %v218
    %v220 = vpop.f32.mrb[0].mxu0
    %v221 = vpop.f32.mrb[0].mxu0
    %v222 = vadd.f32 0.0, %v221
    %v223 = vpop.f32.mrb[0].mxu0
    %224 = vmatprep.mubr.bf16.mxu0 0
    %225 = vmatmul.mubr.bf16.gmra.mrb[0].mxu0 %v172
    %v226 = vpop.f32.mrb[0].mxu0
    %v227 = vadd.f32 0.0, %v226
    %v228 = vpop.f32.mrb[0].mxu0
    %v229 = vpop.f32.mrb[0].mxu0
    %v230 = vadd.f32 0.0, %v229
    %v231 = vpop.f32.mrb[0].mxu0
    %232 = vmatprep.mubr.bf16.mxu0 0
    %233 = vmatmul.mubr.bf16.gmra.mrb[0].mxu0 %v175
    %v234 = vpop.f32.mrb[0].mxu0
    %v235 = vadd.f32 0.0, %v234
    %v236 = vpop.f32.mrb[0].mxu0
    %v237 = vpop.f32.mrb[0].mxu0
    %v238 = vadd.f32 0.0, %v237
    %v239 = vpop.f32.mrb[0].mxu0
    %240 = vmatprep.mubr.bf16.mxu0 0
    %241 = vmatmul.mubr.bf16.gmra.mrb[0].mxu0 %v178
    %v242 = vpop.f32.mrb[0].mxu0
    %v243 = vadd.f32 0.0, %v242
    %v244 = vpop.f32.mrb[0].mxu0
    %v245 = vpop.f32.mrb[0].mxu0
    %v246 = vadd.f32 0.0, %v245
    %v247 = vpop.f32.mrb[0].mxu0
    %248 = vdwg.mxu0
    %v249 = vpack.c.bf16 %v222, %v219
    %v250 = vpack.c.bf16 %v230, %v227
    %v251 = vpack.c.bf16 %v238, %v235
    %v252 = vpack.c.bf16 %v246, %v243
    %v253 = vld [vmem:[%s3] sm:$0xff]
    %v254 = vld [vmem:[%s3 + $0x8] sm:$0xff]
    %v255 = vld [vmem:[%s5] sm:$0x3]
    %v257 = vlaneseq
    %v258 = vshrl.u32 %v257, 7
    %v259 = vsub.s32 0, %v258
    %v260 = vrot.slane %v255, %v259
    %v261 = vlaneseq
    %v262 = vshrl.u32 %v261, 7
    %v263 = vsub.s32 1, %v262
    %v264 = vrot.slane %v255, %v263
    %v269 = vunpack.c.l.b16 %v253
    %v270 = vunpack.c.h.b16 %v253
    %v271 = vunpack.c.l.b16 %v254
    %v272 = vunpack.c.h.b16 %v254
    %v273 = vpack.c.b16 %v271, %v269
    %v274 = vpack.c.b16 %v272, %v270
    %vm277 = vcmask 130048
    %v279 = vsel %vm277, %v249, 0
    %v282 = vsel %vm277, %v250, 0
    %v285 = vsel %vm277, %v251, 0
    %v288 = vsel %vm277, %v252, 0
    %290 = vmatprep.subr.bf16.mxu0 %v274
    %291 = vmatpush1.bf16.msra.mxu0 %v273
    %292 = vmatprep.subr.bf16.mxu0 0
    %293 = vmatpush1.bf16.msra.mxu0 0
    %294 = vmatprep.subr.bf16.mxu0 0
    %295 = vmatpush1.bf16.msra.mxu0 0
    %296 = vmatprep.subr.bf16.mxu0 0
    %297 = vmatpush1.bf16.msra.mxu0 0
    %298 = vmatprep.subr.bf16.mxu0 0
    %299 = vmatpush1.bf16.msra.mxu0 0
    %300 = vmatprep.subr.bf16.mxu0 0
    %301 = vmatpush1.bf16.msra.mxu0 0
    %302 = vmatprep.subr.bf16.mxu0 0
    %303 = vmatpush1.bf16.msra.mxu0 0
    %304 = vmatprep.subr.bf16.mxu0 0
    %305 = vmatpush1.bf16.msra.mxu0 0
    %306 = vmatprep.subr.bf16.mxu0 0
    %307 = vmatpush1.bf16.msra.mxu0 0
    %308 = vmatprep.subr.bf16.mxu0 0
    %309 = vmatpush1.bf16.msra.mxu0 0
    %310 = vmatprep.subr.bf16.mxu0 0
    %311 = vmatpush1.bf16.msra.mxu0 0
    %312 = vmatprep.subr.bf16.mxu0 0
    %313 = vmatpush1.bf16.msra.mxu0 0
    %314 = vmatprep.subr.bf16.mxu0 0
    %315 = vmatpush1.bf16.msra.mxu0 0
    %316 = vmatprep.subr.bf16.mxu0 0
    %317 = vmatpush1.bf16.msra.mxu0 0
    %318 = vmatprep.subr.bf16.mxu0 0
    %319 = vmatpush1.bf16.msra.mxu0 0
    %320 = vmatprep.subr.bf16.mxu0 0
    %321 = vmatpush1.bf16.msra.mxu0 0
    %322 = vmatprep.mubr.bf16.mxu0 0
    %323 = vmatmul.mubr.bf16.gmra.mrb[0].mxu0 %v279
    %v324 = vpop.f32.mrb[0].mxu0
    %v325 = vadd.f32 %v260, %v324
    %v326 = vpop.f32.mrb[0].mxu0
    %v327 = vadd.f32 %v264, %v326
    %v328 = vpop.f32.mrb[0].mxu0
    %v329 = vadd.f32 %v260, %v328
    %v330 = vpop.f32.mrb[0].mxu0
    %v331 = vadd.f32 %v264, %v330
    %332 = vmatprep.mubr.bf16.mxu0 0
    %333 = vmatmul.mubr.bf16.gmra.mrb[0].mxu0 %v282
    %v334 = vpop.f32.mrb[0].mxu0
    %v335 = vadd.f32 %v260, %v334
    %v336 = vpop.f32.mrb[0].mxu0
    %v337 = vadd.f32 %v264, %v336
    %v338 = vpop.f32.mrb[0].mxu0
    %v339 = vadd.f32 %v260, %v338
    %v340 = vpop.f32.mrb[0].mxu0
    %v341 = vadd.f32 %v264, %v340
    %342 = vmatprep.mubr.bf16.mxu0 0
    %343 = vmatmul.mubr.bf16.gmra.mrb[0].mxu0 %v285
    %v344 = vpop.f32.mrb[0].mxu0
    %v345 = vadd.f32 %v260, %v344
    %v346 = vpop.f32.mrb[0].mxu0
    %v347 = vadd.f32 %v264, %v346
    %v348 = vpop.f32.mrb[0].mxu0
    %v349 = vadd.f32 %v260, %v348
    %v350 = vpop.f32.mrb[0].mxu0
    %v351 = vadd.f32 %v264, %v350
    %352 = vmatprep.mubr.bf16.mxu0 0
    %353 = vmatmul.mubr.bf16.gmra.mrb[0].mxu0 %v288
    %v354 = vpop.f32.mrb[0].mxu0
    %v355 = vadd.f32 %v260, %v354
    %v356 = vpop.f32.mrb[0].mxu0
    %v357 = vadd.f32 %v264, %v356
    %v358 = vpop.f32.mrb[0].mxu0
    %v359 = vadd.f32 %v260, %v358
    %v360 = vpop.f32.mrb[0].mxu0
    %v361 = vadd.f32 %v264, %v360
    %362 = vdwg.mxu0
    %v363 = vld [vmem:[%s4] sm:$0xff]
    %v364 = vld [vmem:[%s4 + $0x8] sm:$0xff]
    %v365 = vld [vmem:[%s4 + $0x10] sm:$0xff]
    %v366 = vld [vmem:[%s4 + $0x18] sm:$0xff]
    %v367 = vld [vmem:[%s4 + $0x20] sm:$0xff]
    %v368 = vld [vmem:[%s4 + $0x28] sm:$0xff]
    %v369 = vld [vmem:[%s4 + $0x30] sm:$0xff]
    %v370 = vld [vmem:[%s4 + $0x38] sm:$0xff]
    %v371 = vsel %vm76, %v359, %v325
    %v372 = vsel %vm76, %v361, %v327
    %v381 = vunpack.c.l.b16 %v363
    %v382 = vunpack.c.h.b16 %v363
    %v383 = vunpack.c.l.b16 %v364
    %v384 = vunpack.c.h.b16 %v364
    %v385 = vunpack.c.l.b16 %v365
    %v386 = vunpack.c.h.b16 %v365
    %v387 = vunpack.c.l.b16 %v366
    %v388 = vunpack.c.h.b16 %v366
    %v389 = vunpack.c.l.b16 %v367
    %v390 = vunpack.c.h.b16 %v367
    %v391 = vunpack.c.l.b16 %v368
    %v392 = vunpack.c.h.b16 %v368
    %v393 = vunpack.c.l.b16 %v369
    %v394 = vunpack.c.h.b16 %v369
    %v395 = vunpack.c.l.b16 %v370
    %v396 = vunpack.c.h.b16 %v370
    %v397 = vpack.c.b16 %v383, %v381
    %v398 = vpack.c.b16 %v384, %v382
    %v399 = vpack.c.b16 %v387, %v385
    %v400 = vpack.c.b16 %v388, %v386
    %v401 = vpack.c.b16 %v391, %v389
    %v402 = vpack.c.b16 %v392, %v390
    %v403 = vpack.c.b16 %v395, %v393
    %v404 = vpack.c.b16 %v396, %v394
    %v414 = vsel %vm74, 0, 0
    %416 = vmatprep.subr.bf16.mxu0 %v398
    %417 = vmatpush1.bf16.msra.mxu0 %v397
    %418 = vmatprep.subr.bf16.mxu0 %v400
    %419 = vmatpush1.bf16.msra.mxu0 %v399
    %420 = vmatprep.subr.bf16.mxu0 %v402
    %421 = vmatpush1.bf16.msra.mxu0 %v401
    %422 = vmatprep.subr.bf16.mxu0 %v404
    %423 = vmatpush1.bf16.msra.mxu0 %v403
    %424 = vmatprep.subr.bf16.mxu0 0
    %425 = vmatpush1.bf16.msra.mxu0 0
    %426 = vmatprep.subr.bf16.mxu0 0
    %427 = vmatpush1.bf16.msra.mxu0 0
    %428 = vmatprep.subr.bf16.mxu0 0
    %429 = vmatpush1.bf16.msra.mxu0 0
    %430 = vmatprep.subr.bf16.mxu0 0
    %431 = vmatpush1.bf16.msra.mxu0 0
    %432 = vmatprep.subr.bf16.mxu0 0
    %433 = vmatpush1.bf16.msra.mxu0 0
    %434 = vmatprep.subr.bf16.mxu0 0
    %435 = vmatpush1.bf16.msra.mxu0 0
    %436 = vmatprep.subr.bf16.mxu0 0
    %437 = vmatpush1.bf16.msra.mxu0 0
    %438 = vmatprep.subr.bf16.mxu0 0
    %439 = vmatpush1.bf16.msra.mxu0 0
    %440 = vmatprep.subr.bf16.mxu0 0
    %441 = vmatpush1.bf16.msra.mxu0 0
    %442 = vmatprep.subr.bf16.mxu0 0
    %443 = vmatpush1.bf16.msra.mxu0 0
    %444 = vmatprep.subr.bf16.mxu0 0
    %445 = vmatpush1.bf16.msra.mxu0 0
    %446 = vmatprep.subr.bf16.mxu0 0
    %447 = vmatpush1.bf16.msra.mxu0 0
    %448 = vmatprep.mubr.bf16.mxu0 0
    %449 = vmatmul.mubr.bf16.gmra.mrb[0].mxu0 %v414
    %v450 = vpop.f32.mrb[0].mxu0
    %v451 = vadd.f32 0.0, %v450
    %v452 = vpop.f32.mrb[0].mxu0
    %v453 = vadd.f32 0.0, %v452
    %v454 = vpop.f32.mrb[0].mxu0
    %v455 = vpop.f32.mrb[0].mxu0
    %456 = vdwg.mxu0
    %v457 = vadd.f32 %v371, %v451
    %v458 = vadd.f32 %v372, %v453
    %v459 = vxor.u32 %v457, 2147483648
    %v460 = vxor.u32 %v458, 2147483648
    %v461 = vmul.f32 %v459, 1.442695
    %v462 = vpow.pop %v461
    %v463 = vmul.f32 %v460, 1.442695
    %v464 = vpow.pop %v463
    %v465 = vadd.f32 %v462, 1.0
    %v466 = vadd.f32 %v464, 1.0
    %v467 = vrcp.pop %v465
    %v468 = vmul.f32 1.0, %v467
    %v469 = vrcp.pop %v466
    %v470 = vmul.f32 1.0, %v469
    %v471 = vtanh.pop %v458
    %v472 = vmul.f32 %v468, 0.0
    %474 = vrot.lane.b32.xlu0 %v471, 64
    %v475 = vpop.permute.xlu0 %474
    %v477 = vmul.f32 %v468, %v475
    %479 = vrot.lane.b32.xlu0 %v477, 64
    %v480 = vpop.permute.xlu0 %479
    %v482 = vadd.f32 %v472, %v480
    %v483 = vtanh.pop %v482
    %485 = vrot.lane.b32.xlu0 %v483, 64
    %v486 = vpop.permute.xlu0 %485
    %v488 = vmul.f32 %v470, %v486
    %490 = vrot.lane.b32.xlu0 %v482, 64
    %v491 = vpop.permute.xlu0 %490
    %v493 = vsel %vm81, %v491, 0.0
    %v494 = vsel %vm81, %v488, 0.0
    %v495 = vsel %vm76, %v355, %v329
    %v496 = vsel %vm76, %v357, %v331
    %v497 = vpack.c.bf16 %v494, %v494
    %v499 = vsel %vm74, %v497, 0
    %501 = vmatprep.subr.bf16.mxu0 %v398
    %502 = vmatpush1.bf16.msra.mxu0 %v397
    %503 = vmatprep.subr.bf16.mxu0 %v400
    %504 = vmatpush1.bf16.msra.mxu0 %v399
    %505 = vmatprep.subr.bf16.mxu0 %v402
    %506 = vmatpush1.bf16.msra.mxu0 %v401
    %507 = vmatprep.subr.bf16.mxu0 %v404
    %508 = vmatpush1.bf16.msra.mxu0 %v403
    %509 = vmatprep.subr.bf16.mxu0 0
    %510 = vmatpush1.bf16.msra.mxu0 0
    %511 = vmatprep.subr.bf16.mxu0 0
    %512 = vmatpush1.bf16.msra.mxu0 0
    %513 = vmatprep.subr.bf16.mxu0 0
    %514 = vmatpush1.bf16.msra.mxu0 0
    %515 = vmatprep.subr.bf16.mxu0 0
    %516 = vmatpush1.bf16.msra.mxu0 0
    %517 = vmatprep.subr.bf16.mxu0 0
    %518 = vmatpush1.bf16.msra.mxu0 0
    %519 = vmatprep.subr.bf16.mxu0 0
    %520 = vmatpush1.bf16.msra.mxu0 0
    %521 = vmatprep.subr.bf16.mxu0 0
    %522 = vmatpush1.bf16.msra.mxu0 0
    %523 = vmatprep.subr.bf16.mxu0 0
    %524 = vmatpush1.bf16.msra.mxu0 0
    %525 = vmatprep.subr.bf16.mxu0 0
    %526 = vmatpush1.bf16.msra.mxu0 0
    %527 = vmatprep.subr.bf16.mxu0 0
    %528 = vmatpush1.bf16.msra.mxu0 0
    %529 = vmatprep.subr.bf16.mxu0 0
    %530 = vmatpush1.bf16.msra.mxu0 0
    %531 = vmatprep.subr.bf16.mxu0 0
    %532 = vmatpush1.bf16.msra.mxu0 0
    %533 = vmatprep.mubr.bf16.mxu0 0
    %534 = vmatmul.mubr.bf16.gmra.mrb[0].mxu0 %v499
    %v535 = vpop.f32.mrb[0].mxu0
    %v536 = vadd.f32 0.0, %v535
    %v537 = vpop.f32.mrb[0].mxu0
    %v538 = vadd.f32 0.0, %v537
    %v539 = vpop.f32.mrb[0].mxu0
    %v540 = vpop.f32.mrb[0].mxu0
    %541 = vdwg.mxu0
    %v542 = vadd.f32 %v495, %v536
    %v543 = vadd.f32 %v496, %v538
    %v544 = vxor.u32 %v542, 2147483648
    %v545 = vxor.u32 %v543, 2147483648
    %v546 = vmul.f32 %v544, 1.442695
    %v547 = vpow.pop %v546
    %v548 = vmul.f32 %v545, 1.442695
    %v549 = vpow.pop %v548
    %v550 = vadd.f32 %v547, 1.0
    %v551 = vadd.f32 %v549, 1.0
    %v552 = vrcp.pop %v550
    %v553 = vmul.f32 1.0, %v552
    %v554 = vrcp.pop %v551
    %v555 = vmul.f32 1.0, %v554
    %v556 = vtanh.pop %v543
    %558 = vrot.lane.b32.xlu0 %v493, 64
    %v559 = vpop.permute.xlu0 %558
    %v561 = vmul.f32 %v553, %v559
    %563 = vrot.lane.b32.xlu0 %v556, 64
    %v564 = vpop.permute.xlu0 %563
    %v566 = vmul.f32 %v553, %v564
    %568 = vrot.lane.b32.xlu0 %v566, 64
    %v569 = vpop.permute.xlu0 %568
    %v571 = vadd.f32 %v561, %v569
    %v572 = vtanh.pop %v571
    %574 = vrot.lane.b32.xlu0 %v572, 64
    %v575 = vpop.permute.xlu0 %574
    %v577 = vmul.f32 %v555, %v575
    %579 = vrot.lane.b32.xlu0 %v571, 64
    %v580 = vpop.permute.xlu0 %579
    %v582 = vsel %vm83, %v580, %v493
    %v583 = vsel %vm83, %v577, %v494
    %v584 = vsel %vm83, %v577, 0.0
    %v585 = vsel %vm76, %v349, %v335
    %v586 = vsel %vm76, %v351, %v337
    %v587 = vpack.c.bf16 %v583, %v583
    %v589 = vsel %vm74, %v587, 0
    %591 = vmatprep.subr.bf16.mxu0 %v398
    %592 = vmatpush1.bf16.msra.mxu0 %v397
    %593 = vmatprep.subr.bf16.mxu0 %v400
    %594 = vmatpush1.bf16.msra.mxu0 %v399
    %595 = vmatprep.subr.bf16.mxu0 %v402
    %596 = vmatpush1.bf16.msra.mxu0 %v401
    %597 = vmatprep.subr.bf16.mxu0 %v404
    %598 = vmatpush1.bf16.msra.mxu0 %v403
    %599 = vmatprep.subr.bf16.mxu0 0
    %600 = vmatpush1.bf16.msra.mxu0 0
    %601 = vmatprep.subr.bf16.mxu0 0
    %602 = vmatpush1.bf16.msra.mxu0 0
    %603 = vmatprep.subr.bf16.mxu0 0
    %604 = vmatpush1.bf16.msra.mxu0 0
    %605 = vmatprep.subr.bf16.mxu0 0
    %606 = vmatpush1.bf16.msra.mxu0 0
    %607 = vmatprep.subr.bf16.mxu0 0
    %608 = vmatpush1.bf16.msra.mxu0 0
    %609 = vmatprep.subr.bf16.mxu0 0
    %610 = vmatpush1.bf16.msra.mxu0 0
    %611 = vmatprep.subr.bf16.mxu0 0
    %612 = vmatpush1.bf16.msra.mxu0 0
    %613 = vmatprep.subr.bf16.mxu0 0
    %614 = vmatpush1.bf16.msra.mxu0 0
    %615 = vmatprep.subr.bf16.mxu0 0
    %616 = vmatpush1.bf16.msra.mxu0 0
    %617 = vmatprep.subr.bf16.mxu0 0
    %618 = vmatpush1.bf16.msra.mxu0 0
    %619 = vmatprep.subr.bf16.mxu0 0
    %620 = vmatpush1.bf16.msra.mxu0 0
    %621 = vmatprep.subr.bf16.mxu0 0
    %622 = vmatpush1.bf16.msra.mxu0 0
    %623 = vmatprep.mubr.bf16.mxu0 0
    %624 = vmatmul.mubr.bf16.gmra.mrb[0].mxu0 %v589
    %v625 = vpop.f32.mrb[0].mxu0
    %v626 = vadd.f32 0.0, %v625
    %v627 = vpop.f32.mrb[0].mxu0
    %v628 = vadd.f32 0.0, %v627
    %v629 = vpop.f32.mrb[0].mxu0
    %v630 = vpop.f32.mrb[0].mxu0
    %631 = vdwg.mxu0
    %v632 = vadd.f32 %v585, %v626
    %v633 = vadd.f32 %v586, %v628
    %v634 = vxor.u32 %v632, 2147483648
    %v635 = vxor.u32 %v633, 2147483648
    %v636 = vmul.f32 %v634, 1.442695
    %v637 = vpow.pop %v636
    %v638 = vmul.f32 %v635, 1.442695
    %v639 = vpow.pop %v638
    %v640 = vadd.f32 %v637, 1.0
    %v641 = vadd.f32 %v639, 1.0
    %v642 = vrcp.pop %v640
    %v643 = vmul.f32 1.0, %v642
    %v644 = vrcp.pop %v641
    %v645 = vmul.f32 1.0, %v644
    %v646 = vtanh.pop %v633
    %648 = vrot.lane.b32.xlu0 %v582, 64
    %v649 = vpop.permute.xlu0 %648
    %v651 = vmul.f32 %v643, %v649
    %653 = vrot.lane.b32.xlu0 %v646, 64
    %v654 = vpop.permute.xlu0 %653
    %v656 = vmul.f32 %v643, %v654
    %658 = vrot.lane.b32.xlu0 %v656, 64
    %v659 = vpop.permute.xlu0 %658
    %v661 = vadd.f32 %v651, %v659
    %v662 = vtanh.pop %v661
    %664 = vrot.lane.b32.xlu0 %v662, 64
    %v665 = vpop.permute.xlu0 %664
    %v667 = vmul.f32 %v645, %v665
    %669 = vrot.lane.b32.xlu0 %v661, 64
    %v670 = vpop.permute.xlu0 %669
    %v672 = vsel %vm85, %v670, %v582
    %v673 = vsel %vm85, %v667, %v583
    %v674 = vsel %vm85, %v667, 0.0
    %v675 = vsel %vm76, %v345, %v339
    %v676 = vsel %vm76, %v347, %v341
    %v677 = vpack.c.bf16 %v673, %v673
    %v679 = vsel %vm74, %v677, 0
    %681 = vmatprep.subr.bf16.mxu0 %v398
    %682 = vmatpush1.bf16.msra.mxu0 %v397
    %683 = vmatprep.subr.bf16.mxu0 %v400
    %684 = vmatpush1.bf16.msra.mxu0 %v399
    %685 = vmatprep.subr.bf16.mxu0 %v402
    %686 = vmatpush1.bf16.msra.mxu0 %v401
    %687 = vmatprep.subr.bf16.mxu0 %v404
    %688 = vmatpush1.bf16.msra.mxu0 %v403
    %689 = vmatprep.subr.bf16.mxu0 0
    %690 = vmatpush1.bf16.msra.mxu0 0
    %691 = vmatprep.subr.bf16.mxu0 0
    %692 = vmatpush1.bf16.msra.mxu0 0
    %693 = vmatprep.subr.bf16.mxu0 0
    %694 = vmatpush1.bf16.msra.mxu0 0
    %695 = vmatprep.subr.bf16.mxu0 0
    %696 = vmatpush1.bf16.msra.mxu0 0
    %697 = vmatprep.subr.bf16.mxu0 0
    %698 = vmatpush1.bf16.msra.mxu0 0
    %699 = vmatprep.subr.bf16.mxu0 0
    %700 = vmatpush1.bf16.msra.mxu0 0
    %701 = vmatprep.subr.bf16.mxu0 0
    %702 = vmatpush1.bf16.msra.mxu0 0
    %703 = vmatprep.subr.bf16.mxu0 0
    %704 = vmatpush1.bf16.msra.mxu0 0
    %705 = vmatprep.subr.bf16.mxu0 0
    %706 = vmatpush1.bf16.msra.mxu0 0
    %707 = vmatprep.subr.bf16.mxu0 0
    %708 = vmatpush1.bf16.msra.mxu0 0
    %709 = vmatprep.subr.bf16.mxu0 0
    %710 = vmatpush1.bf16.msra.mxu0 0
    %711 = vmatprep.subr.bf16.mxu0 0
    %712 = vmatpush1.bf16.msra.mxu0 0
    %713 = vmatprep.mubr.bf16.mxu0 0
    %714 = vmatmul.mubr.bf16.gmra.mrb[0].mxu0 %v679
    %v715 = vpop.f32.mrb[0].mxu0
    %v716 = vadd.f32 0.0, %v715
    %v717 = vpop.f32.mrb[0].mxu0
    %v718 = vadd.f32 0.0, %v717
    %v719 = vpop.f32.mrb[0].mxu0
    %v720 = vpop.f32.mrb[0].mxu0
    %721 = vdwg.mxu0
    %v722 = vadd.f32 %v675, %v716
    %v723 = vadd.f32 %v676, %v718
    %v724 = vxor.u32 %v722, 2147483648
    %v725 = vxor.u32 %v723, 2147483648
    %v726 = vmul.f32 %v724, 1.442695
    %v727 = vpow.pop %v726
    %v728 = vmul.f32 %v725, 1.442695
    %v729 = vpow.pop %v728
    %v730 = vadd.f32 %v727, 1.0
    %v731 = vadd.f32 %v729, 1.0
    %v732 = vrcp.pop %v730
    %v733 = vmul.f32 1.0, %v732
    %v734 = vrcp.pop %v731
    %v735 = vmul.f32 1.0, %v734
    %v736 = vtanh.pop %v723
    %738 = vrot.lane.b32.xlu0 %v672, 64
    %v739 = vpop.permute.xlu0 %738
    %v741 = vmul.f32 %v733, %v739
    %743 = vrot.lane.b32.xlu0 %v736, 64
    %v744 = vpop.permute.xlu0 %743
    %v746 = vmul.f32 %v733, %v744
    %748 = vrot.lane.b32.xlu0 %v746, 64
    %v749 = vpop.permute.xlu0 %748
    %v751 = vadd.f32 %v741, %v749
    %v752 = vtanh.pop %v751
    %754 = vrot.lane.b32.xlu0 %v752, 64
    %v755 = vpop.permute.xlu0 %754
    %v757 = vmul.f32 %v735, %v755
    %759 = vrot.lane.b32.xlu0 %v751, 64
    %v760 = vpop.permute.xlu0 %759
    %v762 = vsel %vm87, %v760, %v672
    %v763 = vsel %vm87, %v757, %v673
    %v764 = vsel %vm87, %v757, 0.0
    %v765 = vsel %vm76, %v339, %v345
    %v766 = vsel %vm76, %v341, %v347
    %v767 = vpack.c.bf16 %v763, %v763
    %v769 = vsel %vm74, %v767, 0
    %771 = vmatprep.subr.bf16.mxu0 %v398
    %772 = vmatpush1.bf16.msra.mxu0 %v397
    %773 = vmatprep.subr.bf16.mxu0 %v400
    %774 = vmatpush1.bf16.msra.mxu0 %v399
    %775 = vmatprep.subr.bf16.mxu0 %v402
    %776 = vmatpush1.bf16.msra.mxu0 %v401
    %777 = vmatprep.subr.bf16.mxu0 %v404
    %778 = vmatpush1.bf16.msra.mxu0 %v403
    %779 = vmatprep.subr.bf16.mxu0 0
    %780 = vmatpush1.bf16.msra.mxu0 0
    %781 = vmatprep.subr.bf16.mxu0 0
    %782 = vmatpush1.bf16.msra.mxu0 0
    %783 = vmatprep.subr.bf16.mxu0 0
    %784 = vmatpush1.bf16.msra.mxu0 0
    %785 = vmatprep.subr.bf16.mxu0 0
    %786 = vmatpush1.bf16.msra.mxu0 0
    %787 = vmatprep.subr.bf16.mxu0 0
    %788 = vmatpush1.bf16.msra.mxu0 0
    %789 = vmatprep.subr.bf16.mxu0 0
    %790 = vmatpush1.bf16.msra.mxu0 0
    %791 = vmatprep.subr.bf16.mxu0 0
    %792 = vmatpush1.bf16.msra.mxu0 0
    %793 = vmatprep.subr.bf16.mxu0 0
    %794 = vmatpush1.bf16.msra.mxu0 0
    %795 = vmatprep.subr.bf16.mxu0 0
    %796 = vmatpush1.bf16.msra.mxu0 0
    %797 = vmatprep.subr.bf16.mxu0 0
    %798 = vmatpush1.bf16.msra.mxu0 0
    %799 = vmatprep.subr.bf16.mxu0 0
    %800 = vmatpush1.bf16.msra.mxu0 0
    %801 = vmatprep.subr.bf16.mxu0 0
    %802 = vmatpush1.bf16.msra.mxu0 0
    %803 = vmatprep.mubr.bf16.mxu0 0
    %804 = vmatmul.mubr.bf16.gmra.mrb[0].mxu0 %v769
    %v805 = vpop.f32.mrb[0].mxu0
    %v806 = vadd.f32 0.0, %v805
    %v807 = vpop.f32.mrb[0].mxu0
    %v808 = vadd.f32 0.0, %v807
    %v809 = vpop.f32.mrb[0].mxu0
    %v810 = vpop.f32.mrb[0].mxu0
    %811 = vdwg.mxu0
    %v812 = vadd.f32 %v765, %v806
    %v813 = vadd.f32 %v766, %v808
    %v814 = vxor.u32 %v812, 2147483648
    %v815 = vxor.u32 %v813, 2147483648
    %v816 = vmul.f32 %v814, 1.442695
    %v817 = vpow.pop %v816
    %v818 = vmul.f32 %v815, 1.442695
    %v819 = vpow.pop %v818
    %v820 = vadd.f32 %v817, 1.0
    %v821 = vadd.f32 %v819, 1.0
    %v822 = vrcp.pop %v820
    %v823 = vmul.f32 1.0, %v822
    %v824 = vrcp.pop %v821
    %v825 = vmul.f32 1.0, %v824
    %v826 = vtanh.pop %v813
    %828 = vrot.lane.b32.xlu0 %v762, 64
    %v829 = vpop.permute.xlu0 %828
    %v831 = vmul.f32 %v823, %v829
    %833 = vrot.lane.b32.xlu0 %v826, 64
    %v834 = vpop.permute.xlu0 %833
    %v836 = vmul.f32 %v823, %v834
    %838 = vrot.lane.b32.xlu0 %v836, 64
    %v839 = vpop.permute.xlu0 %838
    %v841 = vadd.f32 %v831, %v839
    %v842 = vtanh.pop %v841
    %844 = vrot.lane.b32.xlu0 %v842, 64
    %v845 = vpop.permute.xlu0 %844
    %v847 = vmul.f32 %v825, %v845
    %849 = vrot.lane.b32.xlu0 %v841, 64
    %v850 = vpop.permute.xlu0 %849
    %v852 = vsel %vm89, %v850, %v762
    %v853 = vsel %vm89, %v847, %v763
    %v854 = vsel %vm89, %v847, 0.0
    %v855 = vsel %vm76, %v335, %v349
    %v856 = vsel %vm76, %v337, %v351
    %v857 = vpack.c.bf16 %v853, %v853
    %v859 = vsel %vm74, %v857, 0
    %861 = vmatprep.subr.bf16.mxu0 %v398
    %862 = vmatpush1.bf16.msra.mxu0 %v397
    %863 = vmatprep.subr.bf16.mxu0 %v400
    %864 = vmatpush1.bf16.msra.mxu0 %v399
    %865 = vmatprep.subr.bf16.mxu0 %v402
    %866 = vmatpush1.bf16.msra.mxu0 %v401
    %867 = vmatprep.subr.bf16.mxu0 %v404
    %868 = vmatpush1.bf16.msra.mxu0 %v403
    %869 = vmatprep.subr.bf16.mxu0 0
    %870 = vmatpush1.bf16.msra.mxu0 0
    %871 = vmatprep.subr.bf16.mxu0 0
    %872 = vmatpush1.bf16.msra.mxu0 0
    %873 = vmatprep.subr.bf16.mxu0 0
    %874 = vmatpush1.bf16.msra.mxu0 0
    %875 = vmatprep.subr.bf16.mxu0 0
    %876 = vmatpush1.bf16.msra.mxu0 0
    %877 = vmatprep.subr.bf16.mxu0 0
    %878 = vmatpush1.bf16.msra.mxu0 0
    %879 = vmatprep.subr.bf16.mxu0 0
    %880 = vmatpush1.bf16.msra.mxu0 0
    %881 = vmatprep.subr.bf16.mxu0 0
    %882 = vmatpush1.bf16.msra.mxu0 0
    %883 = vmatprep.subr.bf16.mxu0 0
    %884 = vmatpush1.bf16.msra.mxu0 0
    %885 = vmatprep.subr.bf16.mxu0 0
    %886 = vmatpush1.bf16.msra.mxu0 0
    %887 = vmatprep.subr.bf16.mxu0 0
    %888 = vmatpush1.bf16.msra.mxu0 0
    %889 = vmatprep.subr.bf16.mxu0 0
    %890 = vmatpush1.bf16.msra.mxu0 0
    %891 = vmatprep.subr.bf16.mxu0 0
    %892 = vmatpush1.bf16.msra.mxu0 0
    %893 = vmatprep.mubr.bf16.mxu0 0
    %894 = vmatmul.mubr.bf16.gmra.mrb[0].mxu0 %v859
    %v895 = vpop.f32.mrb[0].mxu0
    %v896 = vadd.f32 0.0, %v895
    %v897 = vpop.f32.mrb[0].mxu0
    %v898 = vadd.f32 0.0, %v897
    %v899 = vpop.f32.mrb[0].mxu0
    %v900 = vpop.f32.mrb[0].mxu0
    %901 = vdwg.mxu0
    %v902 = vadd.f32 %v855, %v896
    %v903 = vadd.f32 %v856, %v898
    %v904 = vxor.u32 %v902, 2147483648
    %v905 = vxor.u32 %v903, 2147483648
    %v906 = vmul.f32 %v904, 1.442695
    %v907 = vpow.pop %v906
    %v908 = vmul.f32 %v905, 1.442695
    %v909 = vpow.pop %v908
    %v910 = vadd.f32 %v907, 1.0
    %v911 = vadd.f32 %v909, 1.0
    %v912 = vrcp.pop %v910
    %v913 = vmul.f32 1.0, %v912
    %v914 = vrcp.pop %v911
    %v915 = vmul.f32 1.0, %v914
    %v916 = vtanh.pop %v903
    %918 = vrot.lane.b32.xlu0 %v852, 64
    %v919 = vpop.permute.xlu0 %918
    %v921 = vmul.f32 %v913, %v919
    %923 = vrot.lane.b32.xlu0 %v916, 64
    %v924 = vpop.permute.xlu0 %923
    %v926 = vmul.f32 %v913, %v924
    %928 = vrot.lane.b32.xlu0 %v926, 64
    %v929 = vpop.permute.xlu0 %928
    %v931 = vadd.f32 %v921, %v929
    %v932 = vtanh.pop %v931
    %934 = vrot.lane.b32.xlu0 %v932, 64
    %v935 = vpop.permute.xlu0 %934
    %v937 = vmul.f32 %v915, %v935
    %939 = vrot.lane.b32.xlu0 %v931, 64
    %v940 = vpop.permute.xlu0 %939
    %v942 = vsel %vm91, %v940, %v852
    %v943 = vsel %vm91, %v937, %v853
    %v944 = vsel %vm91, %v937, 0.0
    %v945 = vsel %vm76, %v329, %v355
    %v946 = vsel %vm76, %v331, %v357
    %v947 = vpack.c.bf16 %v943, %v943
    %v949 = vsel %vm74, %v947, 0
    %951 = vmatprep.subr.bf16.mxu0 %v398
    %952 = vmatpush1.bf16.msra.mxu0 %v397
    %953 = vmatprep.subr.bf16.mxu0 %v400
    %954 = vmatpush1.bf16.msra.mxu0 %v399
    %955 = vmatprep.subr.bf16.mxu0 %v402
    %956 = vmatpush1.bf16.msra.mxu0 %v401
    %957 = vmatprep.subr.bf16.mxu0 %v404
    %958 = vmatpush1.bf16.msra.mxu0 %v403
    %959 = vmatprep.subr.bf16.mxu0 0
    %960 = vmatpush1.bf16.msra.mxu0 0
    %961 = vmatprep.subr.bf16.mxu0 0
    %962 = vmatpush1.bf16.msra.mxu0 0
    %963 = vmatprep.subr.bf16.mxu0 0
    %964 = vmatpush1.bf16.msra.mxu0 0
    %965 = vmatprep.subr.bf16.mxu0 0
    %966 = vmatpush1.bf16.msra.mxu0 0
    %967 = vmatprep.subr.bf16.mxu0 0
    %968 = vmatpush1.bf16.msra.mxu0 0
    %969 = vmatprep.subr.bf16.mxu0 0
    %970 = vmatpush1.bf16.msra.mxu0 0
    %971 = vmatprep.subr.bf16.mxu0 0
    %972 = vmatpush1.bf16.msra.mxu0 0
    %973 = vmatprep.subr.bf16.mxu0 0
    %974 = vmatpush1.bf16.msra.mxu0 0
    %975 = vmatprep.subr.bf16.mxu0 0
    %976 = vmatpush1.bf16.msra.mxu0 0
    %977 = vmatprep.subr.bf16.mxu0 0
    %978 = vmatpush1.bf16.msra.mxu0 0
    %979 = vmatprep.subr.bf16.mxu0 0
    %980 = vmatpush1.bf16.msra.mxu0 0
    %981 = vmatprep.subr.bf16.mxu0 0
    %982 = vmatpush1.bf16.msra.mxu0 0
    %983 = vmatprep.mubr.bf16.mxu0 0
    %984 = vmatmul.mubr.bf16.gmra.mrb[0].mxu0 %v949
    %v985 = vpop.f32.mrb[0].mxu0
    %v986 = vadd.f32 0.0, %v985
    %v987 = vpop.f32.mrb[0].mxu0
    %v988 = vadd.f32 0.0, %v987
    %v989 = vpop.f32.mrb[0].mxu0
    %v990 = vpop.f32.mrb[0].mxu0
    %991 = vdwg.mxu0
    %v992 = vadd.f32 %v945, %v986
    %v993 = vadd.f32 %v946, %v988
    %v994 = vxor.u32 %v992, 2147483648
    %v995 = vxor.u32 %v993, 2147483648
    %v996 = vmul.f32 %v994, 1.442695
    %v997 = vpow.pop %v996
    %v998 = vmul.f32 %v995, 1.442695
    %v999 = vpow.pop %v998
    %v1000 = vadd.f32 %v997, 1.0
    %v1001 = vadd.f32 %v999, 1.0
    %v1002 = vrcp.pop %v1000
    %v1003 = vmul.f32 1.0, %v1002
    %v1004 = vrcp.pop %v1001
    %v1005 = vmul.f32 1.0, %v1004
    %v1006 = vtanh.pop %v993
    %1008 = vrot.lane.b32.xlu0 %v942, 64
    %v1009 = vpop.permute.xlu0 %1008
    %v1011 = vmul.f32 %v1003, %v1009
    %1013 = vrot.lane.b32.xlu0 %v1006, 64
    %v1014 = vpop.permute.xlu0 %1013
    %v1016 = vmul.f32 %v1003, %v1014
    %1018 = vrot.lane.b32.xlu0 %v1016, 64
    %v1019 = vpop.permute.xlu0 %1018
    %v1021 = vadd.f32 %v1011, %v1019
    %v1022 = vtanh.pop %v1021
    %1024 = vrot.lane.b32.xlu0 %v1022, 64
    %v1025 = vpop.permute.xlu0 %1024
    %v1027 = vmul.f32 %v1005, %v1025
    %1029 = vrot.lane.b32.xlu0 %v1021, 64
    %v1030 = vpop.permute.xlu0 %1029
    %v1032 = vsel %vm93, %v1030, %v942
    %v1033 = vsel %vm93, %v1027, %v943
    %v1034 = vsel %vm93, %v1027, 0.0
    %v1035 = vsel %vm76, %v325, %v359
    %v1036 = vsel %vm76, %v327, %v361
    %v1037 = vpack.c.bf16 %v1033, %v1033
    %v1039 = vsel %vm74, %v1037, 0
    %1041 = vmatprep.subr.bf16.mxu0 %v398
    %1042 = vmatpush1.bf16.msra.mxu0 %v397
    %1043 = vmatprep.subr.bf16.mxu0 %v400
    %1044 = vmatpush1.bf16.msra.mxu0 %v399
    %1045 = vmatprep.subr.bf16.mxu0 %v402
    %1046 = vmatpush1.bf16.msra.mxu0 %v401
    %1047 = vmatprep.subr.bf16.mxu0 %v404
    %1048 = vmatpush1.bf16.msra.mxu0 %v403
    %1049 = vmatprep.subr.bf16.mxu0 0
    %1050 = vmatpush1.bf16.msra.mxu0 0
    %1051 = vmatprep.subr.bf16.mxu0 0
    %1052 = vmatpush1.bf16.msra.mxu0 0
    %1053 = vmatprep.subr.bf16.mxu0 0
    %1054 = vmatpush1.bf16.msra.mxu0 0
    %1055 = vmatprep.subr.bf16.mxu0 0
    %1056 = vmatpush1.bf16.msra.mxu0 0
    %1057 = vmatprep.subr.bf16.mxu0 0
    %1058 = vmatpush1.bf16.msra.mxu0 0
    %1059 = vmatprep.subr.bf16.mxu0 0
    %1060 = vmatpush1.bf16.msra.mxu0 0
    %1061 = vmatprep.subr.bf16.mxu0 0
    %1062 = vmatpush1.bf16.msra.mxu0 0
    %1063 = vmatprep.subr.bf16.mxu0 0
    %1064 = vmatpush1.bf16.msra.mxu0 0
    %1065 = vmatprep.subr.bf16.mxu0 0
    %1066 = vmatpush1.bf16.msra.mxu0 0
    %1067 = vmatprep.subr.bf16.mxu0 0
    %1068 = vmatpush1.bf16.msra.mxu0 0
    %1069 = vmatprep.subr.bf16.mxu0 0
    %1070 = vmatpush1.bf16.msra.mxu0 0
    %1071 = vmatprep.subr.bf16.mxu0 0
    %1072 = vmatpush1.bf16.msra.mxu0 0
    %1073 = vmatprep.mubr.bf16.mxu0 0
    %1074 = vmatmul.mubr.bf16.gmra.mrb[0].mxu0 %v1039
    %v1075 = vpop.f32.mrb[0].mxu0
    %v1076 = vadd.f32 0.0, %v1075
    %v1077 = vpop.f32.mrb[0].mxu0
    %v1078 = vadd.f32 0.0, %v1077
    %v1079 = vpop.f32.mrb[0].mxu0
    %v1080 = vpop.f32.mrb[0].mxu0
    %1081 = vdwg.mxu0
    %v1082 = vadd.f32 %v1035, %v1076
    %v1083 = vadd.f32 %v1036, %v1078
    %v1084 = vxor.u32 %v1082, 2147483648
    %v1085 = vxor.u32 %v1083, 2147483648
    %v1086 = vmul.f32 %v1084, 1.442695
    %v1087 = vpow.pop %v1086
    %v1088 = vmul.f32 %v1085, 1.442695
    %v1089 = vpow.pop %v1088
    %v1090 = vadd.f32 %v1087, 1.0
    %v1091 = vadd.f32 %v1089, 1.0
    %v1092 = vrcp.pop %v1090
    %v1093 = vmul.f32 1.0, %v1092
    %v1094 = vrcp.pop %v1091
    %v1095 = vmul.f32 1.0, %v1094
    %v1096 = vtanh.pop %v1083
    %1098 = vrot.lane.b32.xlu0 %v1032, 64
    %v1099 = vpop.permute.xlu0 %1098
    %v1101 = vmul.f32 %v1093, %v1099
    %1103 = vrot.lane.b32.xlu0 %v1096, 64
    %v1104 = vpop.permute.xlu0 %1103
    %v1106 = vmul.f32 %v1093, %v1104
    %1108 = vrot.lane.b32.xlu0 %v1106, 64
    %v1109 = vpop.permute.xlu0 %1108
    %v1111 = vadd.f32 %v1101, %v1109
    %v1112 = vtanh.pop %v1111
    %1114 = vrot.lane.b32.xlu0 %v1112, 64
    %v1115 = vpop.permute.xlu0 %1114
    %v1117 = vmul.f32 %v1095, %v1115
    %v1118 = vsel %vm95, %v1117, 0.0
    %vm1119 = vcmask 261120
    %v1120 = vsel %vm1119, %v494, %v1118
    %v1121 = vsel %vm1119, %v584, %v1034
    %v1122 = vsel %vm1119, %v674, %v944
    %v1123 = vsel %vm1119, %v764, %v854
    %v1124 = vsel %vm1119, %v854, %v764
    %v1125 = vsel %vm1119, %v944, %v674
    %v1126 = vsel %vm1119, %v1034, %v584
    %v1127 = vsel %vm1119, %v1118, %v494
    %v1128 = vpack.c.bf16 %v1121, %v1120
    %v1129 = vpack.c.bf16 %v1123, %v1122
    %v1130 = vpack.c.bf16 %v1125, %v1124
    %v1131 = vpack.c.bf16 %v1127, %v1126
    %v1132 = vld [vmem:[%s6] sm:$0xff]
    %v1133 = vld [vmem:[%s6 + $0x8] sm:$0xff]
    %v1134 = vld [vmem:[%s6 + $0x10] sm:$0xff]
    %v1135 = vld [vmem:[%s6 + $0x18] sm:$0xff]
    %v1136 = vld [vmem:[%s6 + $0x20] sm:$0xff]
    %v1137 = vld [vmem:[%s6 + $0x28] sm:$0xff]
    %v1138 = vld [vmem:[%s6 + $0x30] sm:$0xff]
    %v1139 = vld [vmem:[%s6 + $0x38] sm:$0xff]
    %v1140 = vld [vmem:[%s8] sm:$0x3]
    %v1142 = vlaneseq
    %v1143 = vshrl.u32 %v1142, 7
    %v1144 = vsub.s32 0, %v1143
    %v1145 = vrot.slane %v1140, %v1144
    %v1146 = vlaneseq
    %v1147 = vshrl.u32 %v1146, 7
    %v1148 = vsub.s32 1, %v1147
    %v1149 = vrot.slane %v1140, %v1148
    %v1160 = vunpack.c.l.b16 %v1132
    %v1161 = vunpack.c.h.b16 %v1132
    %v1162 = vunpack.c.l.b16 %v1133
    %v1163 = vunpack.c.h.b16 %v1133
    %v1164 = vunpack.c.l.b16 %v1134
    %v1165 = vunpack.c.h.b16 %v1134
    %v1166 = vunpack.c.l.b16 %v1135
    %v1167 = vunpack.c.h.b16 %v1135
    %v1168 = vunpack.c.l.b16 %v1136
    %v1169 = vunpack.c.h.b16 %v1136
    %v1170 = vunpack.c.l.b16 %v1137
    %v1171 = vunpack.c.h.b16 %v1137
    %v1172 = vunpack.c.l.b16 %v1138
    %v1173 = vunpack.c.h.b16 %v1138
    %v1174 = vunpack.c.l.b16 %v1139
    %v1175 = vunpack.c.h.b16 %v1139
    %v1176 = vpack.c.b16 %v1162, %v1160
    %v1177 = vpack.c.b16 %v1163, %v1161
    %v1178 = vpack.c.b16 %v1166, %v1164
    %v1179 = vpack.c.b16 %v1167, %v1165
    %v1180 = vpack.c.b16 %v1170, %v1168
    %v1181 = vpack.c.b16 %v1171, %v1169
    %v1182 = vpack.c.b16 %v1174, %v1172
    %v1183 = vpack.c.b16 %v1175, %v1173
    %v1193 = vsel %vm74, %v1128, 0
    %v1196 = vsel %vm74, %v1129, 0
    %v1199 = vsel %vm74, %v1130, 0
    %v1202 = vsel %vm74, %v1131, 0
    %1204 = vmatprep.subr.bf16.mxu0 %v1177
    %1205 = vmatpush1.bf16.msra.mxu0 %v1176
    %1206 = vmatprep.subr.bf16.mxu0 %v1179
    %1207 = vmatpush1.bf16.msra.mxu0 %v1178
    %1208 = vmatprep.subr.bf16.mxu0 %v1181
    %1209 = vmatpush1.bf16.msra.mxu0 %v1180
    %1210 = vmatprep.subr.bf16.mxu0 %v1183
    %1211 = vmatpush1.bf16.msra.mxu0 %v1182
    %1212 = vmatprep.subr.bf16.mxu0 0
    %1213 = vmatpush1.bf16.msra.mxu0 0
    %1214 = vmatprep.subr.bf16.mxu0 0
    %1215 = vmatpush1.bf16.msra.mxu0 0
    %1216 = vmatprep.subr.bf16.mxu0 0
    %1217 = vmatpush1.bf16.msra.mxu0 0
    %1218 = vmatprep.subr.bf16.mxu0 0
    %1219 = vmatpush1.bf16.msra.mxu0 0
    %1220 = vmatprep.subr.bf16.mxu0 0
    %1221 = vmatpush1.bf16.msra.mxu0 0
    %1222 = vmatprep.subr.bf16.mxu0 0
    %1223 = vmatpush1.bf16.msra.mxu0 0
    %1224 = vmatprep.subr.bf16.mxu0 0
    %1225 = vmatpush1.bf16.msra.mxu0 0
    %1226 = vmatprep.subr.bf16.mxu0 0
    %1227 = vmatpush1.bf16.msra.mxu0 0
    %1228 = vmatprep.subr.bf16.mxu0 0
    %1229 = vmatpush1.bf16.msra.mxu0 0
    %1230 = vmatprep.subr.bf16.mxu0 0
    %1231 = vmatpush1.bf16.msra.mxu0 0
    %1232 = vmatprep.subr.bf16.mxu0 0
    %1233 = vmatpush1.bf16.msra.mxu0 0
    %1234 = vmatprep.subr.bf16.mxu0 0
    %1235 = vmatpush1.bf16.msra.mxu0 0
    %1236 = vmatprep.mubr.bf16.mxu0 0
    %1237 = vmatmul.mubr.bf16.gmra.mrb[0].mxu0 %v1193
    %v1238 = vpop.f32.mrb[0].mxu0
    %v1239 = vadd.f32 %v1145, %v1238
    %v1240 = vpop.f32.mrb[0].mxu0
    %v1241 = vadd.f32 %v1149, %v1240
    %v1242 = vpop.f32.mrb[0].mxu0
    %v1243 = vadd.f32 %v1145, %v1242
    %v1244 = vpop.f32.mrb[0].mxu0
    %v1245 = vadd.f32 %v1149, %v1244
    %1246 = vmatprep.mubr.bf16.mxu0 0
    %1247 = vmatmul.mubr.bf16.gmra.mrb[0].mxu0 %v1196
    %v1248 = vpop.f32.mrb[0].mxu0
    %v1249 = vadd.f32 %v1145, %v1248
    %v1250 = vpop.f32.mrb[0].mxu0
    %v1251 = vadd.f32 %v1149, %v1250
    %v1252 = vpop.f32.mrb[0].mxu0
    %v1253 = vadd.f32 %v1145, %v1252
    %v1254 = vpop.f32.mrb[0].mxu0
    %v1255 = vadd.f32 %v1149, %v1254
    %1256 = vmatprep.mubr.bf16.mxu0 0
    %1257 = vmatmul.mubr.bf16.gmra.mrb[0].mxu0 %v1199
    %v1258 = vpop.f32.mrb[0].mxu0
    %v1259 = vadd.f32 %v1145, %v1258
    %v1260 = vpop.f32.mrb[0].mxu0
    %v1261 = vadd.f32 %v1149, %v1260
    %v1262 = vpop.f32.mrb[0].mxu0
    %v1263 = vadd.f32 %v1145, %v1262
    %v1264 = vpop.f32.mrb[0].mxu0
    %v1265 = vadd.f32 %v1149, %v1264
    %1266 = vmatprep.mubr.bf16.mxu0 0
    %1267 = vmatmul.mubr.bf16.gmra.mrb[0].mxu0 %v1202
    %v1268 = vpop.f32.mrb[0].mxu0
    %v1269 = vadd.f32 %v1145, %v1268
    %v1270 = vpop.f32.mrb[0].mxu0
    %v1271 = vadd.f32 %v1149, %v1270
    %v1272 = vpop.f32.mrb[0].mxu0
    %v1273 = vadd.f32 %v1145, %v1272
    %v1274 = vpop.f32.mrb[0].mxu0
    %v1275 = vadd.f32 %v1149, %v1274
    %1276 = vdwg.mxu0
    %v1277 = vld [vmem:[#allocation2] sm:$0xff]
    %v1278 = vld [vmem:[#allocation2 + $0x8] sm:$0xff]
    %v1279 = vld [vmem:[#allocation2 + $0x10] sm:$0xff]
    %v1280 = vld [vmem:[#allocation2 + $0x18] sm:$0xff]
    %v1281 = vld [vmem:[#allocation2 + $0x20] sm:$0xff]
    %v1282 = vld [vmem:[#allocation2 + $0x28] sm:$0xff]
    %v1283 = vld [vmem:[#allocation2 + $0x30] sm:$0xff]
    %v1284 = vld [vmem:[#allocation2 + $0x38] sm:$0xff]
    %v1285 = vsel %vm76, %v1273, %v1239
    %v1286 = vsel %vm76, %v1275, %v1241
    %v1295 = vunpack.c.l.b16 %v1277
    %v1296 = vunpack.c.h.b16 %v1277
    %v1297 = vunpack.c.l.b16 %v1278
    %v1298 = vunpack.c.h.b16 %v1278
    %v1299 = vunpack.c.l.b16 %v1279
    %v1300 = vunpack.c.h.b16 %v1279
    %v1301 = vunpack.c.l.b16 %v1280
    %v1302 = vunpack.c.h.b16 %v1280
    %v1303 = vunpack.c.l.b16 %v1281
    %v1304 = vunpack.c.h.b16 %v1281
    %v1305 = vunpack.c.l.b16 %v1282
    %v1306 = vunpack.c.h.b16 %v1282
    %v1307 = vunpack.c.l.b16 %v1283
    %v1308 = vunpack.c.h.b16 %v1283
    %v1309 = vunpack.c.l.b16 %v1284
    %v1310 = vunpack.c.h.b16 %v1284
    %v1311 = vpack.c.b16 %v1297, %v1295
    %v1312 = vpack.c.b16 %v1298, %v1296
    %v1313 = vpack.c.b16 %v1301, %v1299
    %v1314 = vpack.c.b16 %v1302, %v1300
    %v1315 = vpack.c.b16 %v1305, %v1303
    %v1316 = vpack.c.b16 %v1306, %v1304
    %v1317 = vpack.c.b16 %v1309, %v1307
    %v1318 = vpack.c.b16 %v1310, %v1308
    %1327 = vmatprep.subr.bf16.mxu0 %v1312
    %1328 = vmatpush1.bf16.msra.mxu0 %v1311
    %1329 = vmatprep.subr.bf16.mxu0 %v1314
    %1330 = vmatpush1.bf16.msra.mxu0 %v1313
    %1331 = vmatprep.subr.bf16.mxu0 %v1316
    %1332 = vmatpush1.bf16.msra.mxu0 %v1315
    %1333 = vmatprep.subr.bf16.mxu0 %v1318
    %1334 = vmatpush1.bf16.msra.mxu0 %v1317
    %1335 = vmatprep.subr.bf16.mxu0 0
    %1336 = vmatpush1.bf16.msra.mxu0 0
    %1337 = vmatprep.subr.bf16.mxu0 0
    %1338 = vmatpush1.bf16.msra.mxu0 0
    %1339 = vmatprep.subr.bf16.mxu0 0
    %1340 = vmatpush1.bf16.msra.mxu0 0
    %1341 = vmatprep.subr.bf16.mxu0 0
    %1342 = vmatpush1.bf16.msra.mxu0 0
    %1343 = vmatprep.subr.bf16.mxu0 0
    %1344 = vmatpush1.bf16.msra.mxu0 0
    %1345 = vmatprep.subr.bf16.mxu0 0
    %1346 = vmatpush1.bf16.msra.mxu0 0
    %1347 = vmatprep.subr.bf16.mxu0 0
    %1348 = vmatpush1.bf16.msra.mxu0 0
    %1349 = vmatprep.subr.bf16.mxu0 0
    %1350 = vmatpush1.bf16.msra.mxu0 0
    %1351 = vmatprep.subr.bf16.mxu0 0
    %1352 = vmatpush1.bf16.msra.mxu0 0
    %1353 = vmatprep.subr.bf16.mxu0 0
    %1354 = vmatpush1.bf16.msra.mxu0 0
    %1355 = vmatprep.subr.bf16.mxu0 0
    %1356 = vmatpush1.bf16.msra.mxu0 0
    %1357 = vmatprep.subr.bf16.mxu0 0
    %1358 = vmatpush1.bf16.msra.mxu0 0
    %1359 = vmatprep.mubr.bf16.mxu0 0
    %1360 = vmatmul.mubr.bf16.gmra.mrb[0].mxu0 %v414
    %v1361 = vpop.f32.mrb[0].mxu0
    %v1362 = vadd.f32 0.0, %v1361
    %v1363 = vpop.f32.mrb[0].mxu0
    %v1364 = vadd.f32 0.0, %v1363
    %v1365 = vpop.f32.mrb[0].mxu0
    %v1366 = vpop.f32.mrb[0].mxu0
    %1367 = vdwg.mxu0
    %v1368 = vadd.f32 %v1285, %v1362
    %v1369 = vadd.f32 %v1286, %v1364
    %v1370 = vxor.u32 %v1368, 2147483648
    %v1371 = vxor.u32 %v1369, 2147483648
    %v1372 = vmul.f32 %v1370, 1.442695
    %v1373 = vpow.pop %v1372
    %v1374 = vmul.f32 %v1371, 1.442695
    %v1375 = vpow.pop %v1374
    %v1376 = vadd.f32 %v1373, 1.0
    %v1377 = vadd.f32 %v1375, 1.0
    %v1378 = vrcp.pop %v1376
    %v1379 = vmul.f32 1.0, %v1378
    %v1380 = vrcp.pop %v1377
    %v1381 = vmul.f32 1.0, %v1380
    %v1382 = vtanh.pop %v1369
    %v1383 = vmul.f32 %v1379, 0.0
    %1385 = vrot.lane.b32.xlu0 %v1382, 64
    %v1386 = vpop.permute.xlu0 %1385
    %v1388 = vmul.f32 %v1379, %v1386
    %1390 = vrot.lane.b32.xlu0 %v1388, 64
    %v1391 = vpop.permute.xlu0 %1390
    %v1393 = vadd.f32 %v1383, %v1391
    %v1394 = vtanh.pop %v1393
    %1396 = vrot.lane.b32.xlu0 %v1394, 64
    %v1397 = vpop.permute.xlu0 %1396
    %v1399 = vmul.f32 %v1381, %v1397
    %1401 = vrot.lane.b32.xlu0 %v1393, 64
    %v1402 = vpop.permute.xlu0 %1401
    %v1404 = vsel %vm81, %v1402, 0.0
    %v1405 = vsel %vm81, %v1399, 0.0
    %v1406 = vsel %vm76, %v1269, %v1243
    %v1407 = vsel %vm76, %v1271, %v1245
    %v1408 = vpack.c.bf16 %v1405, %v1405
    %v1410 = vsel %vm74, %v1408, 0
    %1412 = vmatprep.subr.bf16.mxu0 %v1312
    %1413 = vmatpush1.bf16.msra.mxu0 %v1311
    %1414 = vmatprep.subr.bf16.mxu0 %v1314
    %1415 = vmatpush1.bf16.msra.mxu0 %v1313
    %1416 = vmatprep.subr.bf16.mxu0 %v1316
    %1417 = vmatpush1.bf16.msra.mxu0 %v1315
    %1418 = vmatprep.subr.bf16.mxu0 %v1318
    %1419 = vmatpush1.bf16.msra.mxu0 %v1317
    %1420 = vmatprep.subr.bf16.mxu0 0
    %1421 = vmatpush1.bf16.msra.mxu0 0
    %1422 = vmatprep.subr.bf16.mxu0 0
    %1423 = vmatpush1.bf16.msra.mxu0 0
    %1424 = vmatprep.subr.bf16.mxu0 0
    %1425 = vmatpush1.bf16.msra.mxu0 0
    %1426 = vmatprep.subr.bf16.mxu0 0
    %1427 = vmatpush1.bf16.msra.mxu0 0
    %1428 = vmatprep.subr.bf16.mxu0 0
    %1429 = vmatpush1.bf16.msra.mxu0 0
    %1430 = vmatprep.subr.bf16.mxu0 0
    %1431 = vmatpush1.bf16.msra.mxu0 0
    %1432 = vmatprep.subr.bf16.mxu0 0
    %1433 = vmatpush1.bf16.msra.mxu0 0
    %1434 = vmatprep.subr.bf16.mxu0 0
    %1435 = vmatpush1.bf16.msra.mxu0 0
    %1436 = vmatprep.subr.bf16.mxu0 0
    %1437 = vmatpush1.bf16.msra.mxu0 0
    %1438 = vmatprep.subr.bf16.mxu0 0
    %1439 = vmatpush1.bf16.msra.mxu0 0
    %1440 = vmatprep.subr.bf16.mxu0 0
    %1441 = vmatpush1.bf16.msra.mxu0 0
    %1442 = vmatprep.subr.bf16.mxu0 0
    %1443 = vmatpush1.bf16.msra.mxu0 0
    %1444 = vmatprep.mubr.bf16.mxu0 0
    %1445 = vmatmul.mubr.bf16.gmra.mrb[0].mxu0 %v1410
    %v1446 = vpop.f32.mrb[0].mxu0
    %v1447 = vadd.f32 0.0, %v1446
    %v1448 = vpop.f32.mrb[0].mxu0
    %v1449 = vadd.f32 0.0, %v1448
    %v1450 = vpop.f32.mrb[0].mxu0
    %v1451 = vpop.f32.mrb[0].mxu0
    %1452 = vdwg.mxu0
    %v1453 = vadd.f32 %v1406, %v1447
    %v1454 = vadd.f32 %v1407, %v1449
    %v1455 = vxor.u32 %v1453, 2147483648
    %v1456 = vxor.u32 %v1454, 2147483648
    %v1457 = vmul.f32 %v1455, 1.442695
    %v1458 = vpow.pop %v1457
    %v1459 = vmul.f32 %v1456, 1.442695
    %v1460 = vpow.pop %v1459
    %v1461 = vadd.f32 %v1458, 1.0
    %v1462 = vadd.f32 %v1460, 1.0
    %v1463 = vrcp.pop %v1461
    %v1464 = vmul.f32 1.0, %v1463
    %v1465 = vrcp.pop %v1462
    %v1466 = vmul.f32 1.0, %v1465
    %v1467 = vtanh.pop %v1454
    %1469 = vrot.lane.b32.xlu0 %v1404, 64
    %v1470 = vpop.permute.xlu0 %1469
    %v1472 = vmul.f32 %v1464, %v1470
    %1474 = vrot.lane.b32.xlu0 %v1467, 64
    %v1475 = vpop.permute.xlu0 %1474
    %v1477 = vmul.f32 %v1464, %v1475
    %1479 = vrot.lane.b32.xlu0 %v1477, 64
    %v1480 = vpop.permute.xlu0 %1479
    %v1482 = vadd.f32 %v1472, %v1480
    %v1483 = vtanh.pop %v1482
    %1485 = vrot.lane.b32.xlu0 %v1483, 64
    %v1486 = vpop.permute.xlu0 %1485
    %v1488 = vmul.f32 %v1466, %v1486
    %1490 = vrot.lane.b32.xlu0 %v1482, 64
    %v1491 = vpop.permute.xlu0 %1490
    %v1493 = vsel %vm83, %v1491, %v1404
    %v1494 = vsel %vm83, %v1488, %v1405
    %v1495 = vsel %vm76, %v1263, %v1249
    %v1496 = vsel %vm76, %v1265, %v1251
    %v1497 = vpack.c.bf16 %v1494, %v1494
    %v1499 = vsel %vm74, %v1497, 0
    %1501 = vmatprep.subr.bf16.mxu0 %v1312
    %1502 = vmatpush1.bf16.msra.mxu0 %v1311
    %1503 = vmatprep.subr.bf16.mxu0 %v1314
    %1504 = vmatpush1.bf16.msra.mxu0 %v1313
    %1505 = vmatprep.subr.bf16.mxu0 %v1316
    %1506 = vmatpush1.bf16.msra.mxu0 %v1315
    %1507 = vmatprep.subr.bf16.mxu0 %v1318
    %1508 = vmatpush1.bf16.msra.mxu0 %v1317
    %1509 = vmatprep.subr.bf16.mxu0 0
    %1510 = vmatpush1.bf16.msra.mxu0 0
    %1511 = vmatprep.subr.bf16.mxu0 0
    %1512 = vmatpush1.bf16.msra.mxu0 0
    %1513 = vmatprep.subr.bf16.mxu0 0
    %1514 = vmatpush1.bf16.msra.mxu0 0
    %1515 = vmatprep.subr.bf16.mxu0 0
    %1516 = vmatpush1.bf16.msra.mxu0 0
    %1517 = vmatprep.subr.bf16.mxu0 0
    %1518 = vmatpush1.bf16.msra.mxu0 0
    %1519 = vmatprep.subr.bf16.mxu0 0
    %1520 = vmatpush1.bf16.msra.mxu0 0
    %1521 = vmatprep.subr.bf16.mxu0 0
    %1522 = vmatpush1.bf16.msra.mxu0 0
    %1523 = vmatprep.subr.bf16.mxu0 0
    %1524 = vmatpush1.bf16.msra.mxu0 0
    %1525 = vmatprep.subr.bf16.mxu0 0
    %1526 = vmatpush1.bf16.msra.mxu0 0
    %1527 = vmatprep.subr.bf16.mxu0 0
    %1528 = vmatpush1.bf16.msra.mxu0 0
    %1529 = vmatprep.subr.bf16.mxu0 0
    %1530 = vmatpush1.bf16.msra.mxu0 0
    %1531 = vmatprep.subr.bf16.mxu0 0
    %1532 = vmatpush1.bf16.msra.mxu0 0
    %1533 = vmatprep.mubr.bf16.mxu0 0
    %1534 = vmatmul.mubr.bf16.gmra.mrb[0].mxu0 %v1499
    %v1535 = vpop.f32.mrb[0].mxu0
    %v1536 = vadd.f32 0.0, %v1535
    %v1537 = vpop.f32.mrb[0].mxu0
    %v1538 = vadd.f32 0.0, %v1537
    %v1539 = vpop.f32.mrb[0].mxu0
    %v1540 = vpop.f32.mrb[0].mxu0
    %1541 = vdwg.mxu0
    %v1542 = vadd.f32 %v1495, %v1536
    %v1543 = vadd.f32 %v1496, %v1538
    %v1544 = vxor.u32 %v1542, 2147483648
    %v1545 = vxor.u32 %v1543, 2147483648
    %v1546 = vmul.f32 %v1544, 1.442695
    %v1547 = vpow.pop %v1546
    %v1548 = vmul.f32 %v1545, 1.442695
    %v1549 = vpow.pop %v1548
    %v1550 = vadd.f32 %v1547, 1.0
    %v1551 = vadd.f32 %v1549, 1.0
    %v1552 = vrcp.pop %v1550
    %v1553 = vmul.f32 1.0, %v1552
    %v1554 = vrcp.pop %v1551
    %v1555 = vmul.f32 1.0, %v1554
    %v1556 = vtanh.pop %v1543
    %1558 = vrot.lane.b32.xlu0 %v1493, 64
    %v1559 = vpop.permute.xlu0 %1558
    %v1561 = vmul.f32 %v1553, %v1559
    %1563 = vrot.lane.b32.xlu0 %v1556, 64
    %v1564 = vpop.permute.xlu0 %1563
    %v1566 = vmul.f32 %v1553, %v1564
    %1568 = vrot.lane.b32.xlu0 %v1566, 64
    %v1569 = vpop.permute.xlu0 %1568
    %v1571 = vadd.f32 %v1561, %v1569
    %v1572 = vtanh.pop %v1571
    %1574 = vrot.lane.b32.xlu0 %v1572, 64
    %v1575 = vpop.permute.xlu0 %1574
    %v1577 = vmul.f32 %v1555, %v1575
    %1579 = vrot.lane.b32.xlu0 %v1571, 64
    %v1580 = vpop.permute.xlu0 %1579
    %v1582 = vsel %vm85, %v1580, %v1493
    %v1583 = vsel %vm85, %v1577, %v1494
    %v1584 = vsel %vm76, %v1259, %v1253
    %v1585 = vsel %vm76, %v1261, %v1255
    %v1586 = vpack.c.bf16 %v1583, %v1583
    %v1588 = vsel %vm74, %v1586, 0
    %1590 = vmatprep.subr.bf16.mxu0 %v1312
    %1591 = vmatpush1.bf16.msra.mxu0 %v1311
    %1592 = vmatprep.subr.bf16.mxu0 %v1314
    %1593 = vmatpush1.bf16.msra.mxu0 %v1313
    %1594 = vmatprep.subr.bf16.mxu0 %v1316
    %1595 = vmatpush1.bf16.msra.mxu0 %v1315
    %1596 = vmatprep.subr.bf16.mxu0 %v1318
    %1597 = vmatpush1.bf16.msra.mxu0 %v1317
    %1598 = vmatprep.subr.bf16.mxu0 0
    %1599 = vmatpush1.bf16.msra.mxu0 0
    %1600 = vmatprep.subr.bf16.mxu0 0
    %1601 = vmatpush1.bf16.msra.mxu0 0
    %1602 = vmatprep.subr.bf16.mxu0 0
    %1603 = vmatpush1.bf16.msra.mxu0 0
    %1604 = vmatprep.subr.bf16.mxu0 0
    %1605 = vmatpush1.bf16.msra.mxu0 0
    %1606 = vmatprep.subr.bf16.mxu0 0
    %1607 = vmatpush1.bf16.msra.mxu0 0
    %1608 = vmatprep.subr.bf16.mxu0 0
    %1609 = vmatpush1.bf16.msra.mxu0 0
    %1610 = vmatprep.subr.bf16.mxu0 0
    %1611 = vmatpush1.bf16.msra.mxu0 0
    %1612 = vmatprep.subr.bf16.mxu0 0
    %1613 = vmatpush1.bf16.msra.mxu0 0
    %1614 = vmatprep.subr.bf16.mxu0 0
    %1615 = vmatpush1.bf16.msra.mxu0 0
    %1616 = vmatprep.subr.bf16.mxu0 0
    %1617 = vmatpush1.bf16.msra.mxu0 0
    %1618 = vmatprep.subr.bf16.mxu0 0
    %1619 = vmatpush1.bf16.msra.mxu0 0
    %1620 = vmatprep.subr.bf16.mxu0 0
    %1621 = vmatpush1.bf16.msra.mxu0 0
    %1622 = vmatprep.mubr.bf16.mxu0 0
    %1623 = vmatmul.mubr.bf16.gmra.mrb[0].mxu0 %v1588
    %v1624 = vpop.f32.mrb[0].mxu0
    %v1625 = vadd.f32 0.0, %v1624
    %v1626 = vpop.f32.mrb[0].mxu0
    %v1627 = vadd.f32 0.0, %v1626
    %v1628 = vpop.f32.mrb[0].mxu0
    %v1629 = vpop.f32.mrb[0].mxu0
    %1630 = vdwg.mxu0
    %v1631 = vadd.f32 %v1584, %v1625
    %v1632 = vadd.f32 %v1585, %v1627
    %v1633 = vxor.u32 %v1631, 2147483648
    %v1634 = vxor.u32 %v1632, 2147483648
    %v1635 = vmul.f32 %v1633, 1.442695
    %v1636 = vpow.pop %v1635
    %v1637 = vmul.f32 %v1634, 1.442695
    %v1638 = vpow.pop %v1637
    %v1639 = vadd.f32 %v1636, 1.0
    %v1640 = vadd.f32 %v1638, 1.0
    %v1641 = vrcp.pop %v1639
    %v1642 = vmul.f32 1.0, %v1641
    %v1643 = vrcp.pop %v1640
    %v1644 = vmul.f32 1.0, %v1643
    %v1645 = vtanh.pop %v1632
    %1647 = vrot.lane.b32.xlu0 %v1582, 64
    %v1648 = vpop.permute.xlu0 %1647
    %v1650 = vmul.f32 %v1642, %v1648
    %1652 = vrot.lane.b32.xlu0 %v1645, 64
    %v1653 = vpop.permute.xlu0 %1652
    %v1655 = vmul.f32 %v1642, %v1653
    %1657 = vrot.lane.b32.xlu0 %v1655, 64
    %v1658 = vpop.permute.xlu0 %1657
    %v1660 = vadd.f32 %v1650, %v1658
    %v1661 = vtanh.pop %v1660
    %1663 = vrot.lane.b32.xlu0 %v1661, 64
    %v1664 = vpop.permute.xlu0 %1663
    %v1666 = vmul.f32 %v1644, %v1664
    %1668 = vrot.lane.b32.xlu0 %v1660, 64
    %v1669 = vpop.permute.xlu0 %1668
    %v1671 = vsel %vm87, %v1669, %v1582
    %v1672 = vsel %vm87, %v1666, %v1583
    %v1673 = vsel %vm76, %v1253, %v1259
    %v1674 = vsel %vm76, %v1255, %v1261
    %v1675 = vpack.c.bf16 %v1672, %v1672
    %v1677 = vsel %vm74, %v1675, 0
    %1679 = vmatprep.subr.bf16.mxu0 %v1312
    %1680 = vmatpush1.bf16.msra.mxu0 %v1311
    %1681 = vmatprep.subr.bf16.mxu0 %v1314
    %1682 = vmatpush1.bf16.msra.mxu0 %v1313
    %1683 = vmatprep.subr.bf16.mxu0 %v1316
    %1684 = vmatpush1.bf16.msra.mxu0 %v1315
    %1685 = vmatprep.subr.bf16.mxu0 %v1318
    %1686 = vmatpush1.bf16.msra.mxu0 %v1317
    %1687 = vmatprep.subr.bf16.mxu0 0
    %1688 = vmatpush1.bf16.msra.mxu0 0
    %1689 = vmatprep.subr.bf16.mxu0 0
    %1690 = vmatpush1.bf16.msra.mxu0 0
    %1691 = vmatprep.subr.bf16.mxu0 0
    %1692 = vmatpush1.bf16.msra.mxu0 0
    %1693 = vmatprep.subr.bf16.mxu0 0
    %1694 = vmatpush1.bf16.msra.mxu0 0
    %1695 = vmatprep.subr.bf16.mxu0 0
    %1696 = vmatpush1.bf16.msra.mxu0 0
    %1697 = vmatprep.subr.bf16.mxu0 0
    %1698 = vmatpush1.bf16.msra.mxu0 0
    %1699 = vmatprep.subr.bf16.mxu0 0
    %1700 = vmatpush1.bf16.msra.mxu0 0
    %1701 = vmatprep.subr.bf16.mxu0 0
    %1702 = vmatpush1.bf16.msra.mxu0 0
    %1703 = vmatprep.subr.bf16.mxu0 0
    %1704 = vmatpush1.bf16.msra.mxu0 0
    %1705 = vmatprep.subr.bf16.mxu0 0
    %1706 = vmatpush1.bf16.msra.mxu0 0
    %1707 = vmatprep.subr.bf16.mxu0 0
    %1708 = vmatpush1.bf16.msra.mxu0 0
    %1709 = vmatprep.subr.bf16.mxu0 0
    %1710 = vmatpush1.bf16.msra.mxu0 0
    %1711 = vmatprep.mubr.bf16.mxu0 0
    %1712 = vmatmul.mubr.bf16.gmra.mrb[0].mxu0 %v1677
    %v1713 = vpop.f32.mrb[0].mxu0
    %v1714 = vadd.f32 0.0, %v1713
    %v1715 = vpop.f32.mrb[0].mxu0
    %v1716 = vadd.f32 0.0, %v1715
    %v1717 = vpop.f32.mrb[0].mxu0
    %v1718 = vpop.f32.mrb[0].mxu0
    %1719 = vdwg.mxu0
    %v1720 = vadd.f32 %v1673, %v1714
    %v1721 = vadd.f32 %v1674, %v1716
    %v1722 = vxor.u32 %v1720, 2147483648
    %v1723 = vxor.u32 %v1721, 2147483648
    %v1724 = vmul.f32 %v1722, 1.442695
    %v1725 = vpow.pop %v1724
    %v1726 = vmul.f32 %v1723, 1.442695
    %v1727 = vpow.pop %v1726
    %v1728 = vadd.f32 %v1725, 1.0
    %v1729 = vadd.f32 %v1727, 1.0
    %v1730 = vrcp.pop %v1728
    %v1731 = vmul.f32 1.0, %v1730
    %v1732 = vrcp.pop %v1729
    %v1733 = vmul.f32 1.0, %v1732
    %v1734 = vtanh.pop %v1721
    %1736 = vrot.lane.b32.xlu0 %v1671, 64
    %v1737 = vpop.permute.xlu0 %1736
    %v1739 = vmul.f32 %v1731, %v1737
    %1741 = vrot.lane.b32.xlu0 %v1734, 64
    %v1742 = vpop.permute.xlu0 %1741
    %v1744 = vmul.f32 %v1731, %v1742
    %1746 = vrot.lane.b32.xlu0 %v1744, 64
    %v1747 = vpop.permute.xlu0 %1746
    %v1749 = vadd.f32 %v1739, %v1747
    %v1750 = vtanh.pop %v1749
    %1752 = vrot.lane.b32.xlu0 %v1750, 64
    %v1753 = vpop.permute.xlu0 %1752
    %v1755 = vmul.f32 %v1733, %v1753
    %1757 = vrot.lane.b32.xlu0 %v1749, 64
    %v1758 = vpop.permute.xlu0 %1757
    %v1760 = vsel %vm89, %v1758, %v1671
    %v1761 = vsel %vm89, %v1755, %v1672
    %v1762 = vsel %vm76, %v1249, %v1263
    %v1763 = vsel %vm76, %v1251, %v1265
    %v1764 = vpack.c.bf16 %v1761, %v1761
    %v1766 = vsel %vm74, %v1764, 0
    %1768 = vmatprep.subr.bf16.mxu0 %v1312
    %1769 = vmatpush1.bf16.msra.mxu0 %v1311
    %1770 = vmatprep.subr.bf16.mxu0 %v1314
    %1771 = vmatpush1.bf16.msra.mxu0 %v1313
    %1772 = vmatprep.subr.bf16.mxu0 %v1316
    %1773 = vmatpush1.bf16.msra.mxu0 %v1315
    %1774 = vmatprep.subr.bf16.mxu0 %v1318
    %1775 = vmatpush1.bf16.msra.mxu0 %v1317
    %1776 = vmatprep.subr.bf16.mxu0 0
    %1777 = vmatpush1.bf16.msra.mxu0 0
    %1778 = vmatprep.subr.bf16.mxu0 0
    %1779 = vmatpush1.bf16.msra.mxu0 0
    %1780 = vmatprep.subr.bf16.mxu0 0
    %1781 = vmatpush1.bf16.msra.mxu0 0
    %1782 = vmatprep.subr.bf16.mxu0 0
    %1783 = vmatpush1.bf16.msra.mxu0 0
    %1784 = vmatprep.subr.bf16.mxu0 0
    %1785 = vmatpush1.bf16.msra.mxu0 0
    %1786 = vmatprep.subr.bf16.mxu0 0
    %1787 = vmatpush1.bf16.msra.mxu0 0
    %1788 = vmatprep.subr.bf16.mxu0 0
    %1789 = vmatpush1.bf16.msra.mxu0 0
    %1790 = vmatprep.subr.bf16.mxu0 0
    %1791 = vmatpush1.bf16.msra.mxu0 0
    %1792 = vmatprep.subr.bf16.mxu0 0
    %1793 = vmatpush1.bf16.msra.mxu0 0
    %1794 = vmatprep.subr.bf16.mxu0 0
    %1795 = vmatpush1.bf16.msra.mxu0 0
    %1796 = vmatprep.subr.bf16.mxu0 0
    %1797 = vmatpush1.bf16.msra.mxu0 0
    %1798 = vmatprep.subr.bf16.mxu0 0
    %1799 = vmatpush1.bf16.msra.mxu0 0
    %1800 = vmatprep.mubr.bf16.mxu0 0
    %1801 = vmatmul.mubr.bf16.gmra.mrb[0].mxu0 %v1766
    %v1802 = vpop.f32.mrb[0].mxu0
    %v1803 = vadd.f32 0.0, %v1802
    %v1804 = vpop.f32.mrb[0].mxu0
    %v1805 = vadd.f32 0.0, %v1804
    %v1806 = vpop.f32.mrb[0].mxu0
    %v1807 = vpop.f32.mrb[0].mxu0
    %1808 = vdwg.mxu0
    %v1809 = vadd.f32 %v1762, %v1803
    %v1810 = vadd.f32 %v1763, %v1805
    %v1811 = vxor.u32 %v1809, 2147483648
    %v1812 = vxor.u32 %v1810, 2147483648
    %v1813 = vmul.f32 %v1811, 1.442695
    %v1814 = vpow.pop %v1813
    %v1815 = vmul.f32 %v1812, 1.442695
    %v1816 = vpow.pop %v1815
    %v1817 = vadd.f32 %v1814, 1.0
    %v1818 = vadd.f32 %v1816, 1.0
    %v1819 = vrcp.pop %v1817
    %v1820 = vmul.f32 1.0, %v1819
    %v1821 = vrcp.pop %v1818
    %v1822 = vmul.f32 1.0, %v1821
    %v1823 = vtanh.pop %v1810
    %1825 = vrot.lane.b32.xlu0 %v1760, 64
    %v1826 = vpop.permute.xlu0 %1825
    %v1828 = vmul.f32 %v1820, %v1826
    %1830 = vrot.lane.b32.xlu0 %v1823, 64
    %v1831 = vpop.permute.xlu0 %1830
    %v1833 = vmul.f32 %v1820, %v1831
    %1835 = vrot.lane.b32.xlu0 %v1833, 64
    %v1836 = vpop.permute.xlu0 %1835
    %v1838 = vadd.f32 %v1828, %v1836
    %v1839 = vtanh.pop %v1838
    %1841 = vrot.lane.b32.xlu0 %v1839, 64
    %v1842 = vpop.permute.xlu0 %1841
    %v1844 = vmul.f32 %v1822, %v1842
    %1846 = vrot.lane.b32.xlu0 %v1838, 64
    %v1847 = vpop.permute.xlu0 %1846
    %v1849 = vsel %vm91, %v1847, %v1760
    %v1850 = vsel %vm91, %v1844, %v1761
    %v1851 = vsel %vm76, %v1243, %v1269
    %v1852 = vsel %vm76, %v1245, %v1271
    %v1853 = vpack.c.bf16 %v1850, %v1850
    %v1855 = vsel %vm74, %v1853, 0
    %1857 = vmatprep.subr.bf16.mxu0 %v1312
    %1858 = vmatpush1.bf16.msra.mxu0 %v1311
    %1859 = vmatprep.subr.bf16.mxu0 %v1314
    %1860 = vmatpush1.bf16.msra.mxu0 %v1313
    %1861 = vmatprep.subr.bf16.mxu0 %v1316
    %1862 = vmatpush1.bf16.msra.mxu0 %v1315
    %1863 = vmatprep.subr.bf16.mxu0 %v1318
    %1864 = vmatpush1.bf16.msra.mxu0 %v1317
    %1865 = vmatprep.subr.bf16.mxu0 0
    %1866 = vmatpush1.bf16.msra.mxu0 0
    %1867 = vmatprep.subr.bf16.mxu0 0
    %1868 = vmatpush1.bf16.msra.mxu0 0
    %1869 = vmatprep.subr.bf16.mxu0 0
    %1870 = vmatpush1.bf16.msra.mxu0 0
    %1871 = vmatprep.subr.bf16.mxu0 0
    %1872 = vmatpush1.bf16.msra.mxu0 0
    %1873 = vmatprep.subr.bf16.mxu0 0
    %1874 = vmatpush1.bf16.msra.mxu0 0
    %1875 = vmatprep.subr.bf16.mxu0 0
    %1876 = vmatpush1.bf16.msra.mxu0 0
    %1877 = vmatprep.subr.bf16.mxu0 0
    %1878 = vmatpush1.bf16.msra.mxu0 0
    %1879 = vmatprep.subr.bf16.mxu0 0
    %1880 = vmatpush1.bf16.msra.mxu0 0
    %1881 = vmatprep.subr.bf16.mxu0 0
    %1882 = vmatpush1.bf16.msra.mxu0 0
    %1883 = vmatprep.subr.bf16.mxu0 0
    %1884 = vmatpush1.bf16.msra.mxu0 0
    %1885 = vmatprep.subr.bf16.mxu0 0
    %1886 = vmatpush1.bf16.msra.mxu0 0
    %1887 = vmatprep.subr.bf16.mxu0 0
    %1888 = vmatpush1.bf16.msra.mxu0 0
    %1889 = vmatprep.mubr.bf16.mxu0 0
    %1890 = vmatmul.mubr.bf16.gmra.mrb[0].mxu0 %v1855
    %v1891 = vpop.f32.mrb[0].mxu0
    %v1892 = vadd.f32 0.0, %v1891
    %v1893 = vpop.f32.mrb[0].mxu0
    %v1894 = vadd.f32 0.0, %v1893
    %v1895 = vpop.f32.mrb[0].mxu0
    %v1896 = vpop.f32.mrb[0].mxu0
    %1897 = vdwg.mxu0
    %v1898 = vadd.f32 %v1851, %v1892
    %v1899 = vadd.f32 %v1852, %v1894
    %v1900 = vxor.u32 %v1898, 2147483648
    %v1901 = vxor.u32 %v1899, 2147483648
    %v1902 = vmul.f32 %v1900, 1.442695
    %v1903 = vpow.pop %v1902
    %v1904 = vmul.f32 %v1901, 1.442695
    %v1905 = vpow.pop %v1904
    %v1906 = vadd.f32 %v1903, 1.0
    %v1907 = vadd.f32 %v1905, 1.0
    %v1908 = vrcp.pop %v1906
    %v1909 = vmul.f32 1.0, %v1908
    %v1910 = vrcp.pop %v1907
    %v1911 = vmul.f32 1.0, %v1910
    %v1912 = vtanh.pop %v1899
    %1914 = vrot.lane.b32.xlu0 %v1849, 64
    %v1915 = vpop.permute.xlu0 %1914
    %v1917 = vmul.f32 %v1909, %v1915
    %1919 = vrot.lane.b32.xlu0 %v1912, 64
    %v1920 = vpop.permute.xlu0 %1919
    %v1922 = vmul.f32 %v1909, %v1920
    %1924 = vrot.lane.b32.xlu0 %v1922, 64
    %v1925 = vpop.permute.xlu0 %1924
    %v1927 = vadd.f32 %v1917, %v1925
    %v1928 = vtanh.pop %v1927
    %1930 = vrot.lane.b32.xlu0 %v1928, 64
    %v1931 = vpop.permute.xlu0 %1930
    %v1933 = vmul.f32 %v1911, %v1931
    %1935 = vrot.lane.b32.xlu0 %v1927, 64
    %v1936 = vpop.permute.xlu0 %1935
    %v1938 = vsel %vm93, %v1936, %v1849
    %v1939 = vsel %vm93, %v1933, %v1850
    %v1940 = vsel %vm76, %v1239, %v1273
    %v1941 = vsel %vm76, %v1241, %v1275
    %v1942 = vpack.c.bf16 %v1939, %v1939
    %v1944 = vsel %vm74, %v1942, 0
    %1946 = vmatprep.subr.bf16.mxu0 %v1312
    %1947 = vmatpush1.bf16.msra.mxu0 %v1311
    %1948 = vmatprep.subr.bf16.mxu0 %v1314
    %1949 = vmatpush1.bf16.msra.mxu0 %v1313
    %1950 = vmatprep.subr.bf16.mxu0 %v1316
    %1951 = vmatpush1.bf16.msra.mxu0 %v1315
    %1952 = vmatprep.subr.bf16.mxu0 %v1318
    %1953 = vmatpush1.bf16.msra.mxu0 %v1317
    %1954 = vmatprep.subr.bf16.mxu0 0
    %1955 = vmatpush1.bf16.msra.mxu0 0
    %1956 = vmatprep.subr.bf16.mxu0 0
    %1957 = vmatpush1.bf16.msra.mxu0 0
    %1958 = vmatprep.subr.bf16.mxu0 0
    %1959 = vmatpush1.bf16.msra.mxu0 0
    %1960 = vmatprep.subr.bf16.mxu0 0
    %1961 = vmatpush1.bf16.msra.mxu0 0
    %1962 = vmatprep.subr.bf16.mxu0 0
    %1963 = vmatpush1.bf16.msra.mxu0 0
    %1964 = vmatprep.subr.bf16.mxu0 0
    %1965 = vmatpush1.bf16.msra.mxu0 0
    %1966 = vmatprep.subr.bf16.mxu0 0
    %1967 = vmatpush1.bf16.msra.mxu0 0
    %1968 = vmatprep.subr.bf16.mxu0 0
    %1969 = vmatpush1.bf16.msra.mxu0 0
    %1970 = vmatprep.subr.bf16.mxu0 0
    %1971 = vmatpush1.bf16.msra.mxu0 0
    %1972 = vmatprep.subr.bf16.mxu0 0
    %1973 = vmatpush1.bf16.msra.mxu0 0
    %1974 = vmatprep.subr.bf16.mxu0 0
    %1975 = vmatpush1.bf16.msra.mxu0 0
    %1976 = vmatprep.subr.bf16.mxu0 0
    %1977 = vmatpush1.bf16.msra.mxu0 0
    %1978 = vmatprep.mubr.bf16.mxu0 0
    %1979 = vmatmul.mubr.bf16.gmra.mrb[0].mxu0 %v1944
    %v1980 = vpop.f32.mrb[0].mxu0
    %v1981 = vadd.f32 0.0, %v1980
    %v1982 = vpop.f32.mrb[0].mxu0
    %v1983 = vadd.f32 0.0, %v1982
    %v1984 = vpop.f32.mrb[0].mxu0
    %v1985 = vpop.f32.mrb[0].mxu0
    %1986 = vdwg.mxu0
    %v1987 = vadd.f32 %v1940, %v1981
    %v1988 = vadd.f32 %v1941, %v1983
    %v1989 = vxor.u32 %v1987, 2147483648
    %v1990 = vxor.u32 %v1988, 2147483648
    %v1991 = vmul.f32 %v1989, 1.442695
    %v1992 = vpow.pop %v1991
    %v1993 = vmul.f32 %v1990, 1.442695
    %v1994 = vpow.pop %v1993
    %v1995 = vadd.f32 %v1992, 1.0
    %v1996 = vadd.f32 %v1994, 1.0
    %v1997 = vrcp.pop %v1995
    %v1998 = vmul.f32 1.0, %v1997
    %v1999 = vrcp.pop %v1996
    %v2000 = vmul.f32 1.0, %v1999
    %v2001 = vtanh.pop %v1988
    %2003 = vrot.lane.b32.xlu0 %v1938, 64
    %v2004 = vpop.permute.xlu0 %2003
    %v2006 = vmul.f32 %v1998, %v2004
    %2008 = vrot.lane.b32.xlu0 %v2001, 64
    %v2009 = vpop.permute.xlu0 %2008
    %v2011 = vmul.f32 %v1998, %v2009
    %2013 = vrot.lane.b32.xlu0 %v2011, 64
    %v2014 = vpop.permute.xlu0 %2013
    %v2016 = vadd.f32 %v2006, %v2014
    %v2017 = vtanh.pop %v2016
    %2019 = vrot.lane.b32.xlu0 %v2017, 64
    %v2020 = vpop.permute.xlu0 %2019
    %v2022 = vmul.f32 %v2000, %v2020
    %v2023 = vsel %vm95, %v2022, %v1939
    %v2024 = vld [vmem:[#allocation5] sm:$0xff]
    %v2025 = vld [vmem:[#allocation5 + $0x8] sm:$0xff]
    %v2026 = vld [vmem:[#allocation5 + $0x10] sm:$0xff]
    %v2027 = vld [vmem:[#allocation5 + $0x18] sm:$0xff]
    %v2028 = vld [vmem:[#allocation5 + $0x20] sm:$0xff]
    %v2029 = vld [vmem:[#allocation5 + $0x28] sm:$0xff]
    %v2030 = vld [vmem:[#allocation5 + $0x30] sm:$0xff]
    %v2031 = vld [vmem:[#allocation5 + $0x38] sm:$0xff]
    %v2032 = vld [vmem:[%s10] sm:$0x1]
    %v2034 = vlaneseq
    %v2035 = vshrl.u32 %v2034, 7
    %v2036 = vsub.s32 0, %v2035
    %v2037 = vrot.slane %v2032, %v2036
    %v2040 = vsel %vm74, %v2023, 0
    %2042 = vmatprep.subr.mxu0 0.0
    %2043 = vmatpush1.msra.mxu0 %v2024
    %2044 = vmatprep.subr.mxu0 0.0
    %2045 = vmatpush1.msra.mxu0 %v2025
    %2046 = vmatprep.subr.mxu0 0.0
    %2047 = vmatpush1.msra.mxu0 %v2026
    %2048 = vmatprep.subr.mxu0 0.0
    %2049 = vmatpush1.msra.mxu0 %v2027
    %2050 = vmatprep.subr.mxu0 0.0
    %2051 = vmatpush1.msra.mxu0 %v2028
    %2052 = vmatprep.subr.mxu0 0.0
    %2053 = vmatpush1.msra.mxu0 %v2029
    %2054 = vmatprep.subr.mxu0 0.0
    %2055 = vmatpush1.msra.mxu0 %v2030
    %2056 = vmatprep.subr.mxu0 0.0
    %2057 = vmatpush1.msra.mxu0 %v2031
    %2058 = vmatprep.subr.mxu0 0.0
    %2059 = vmatpush1.msra.mxu0 0.0
    %2060 = vmatprep.subr.mxu0 0.0
    %2061 = vmatpush1.msra.mxu0 0.0
    %2062 = vmatprep.subr.mxu0 0.0
    %2063 = vmatpush1.msra.mxu0 0.0
    %2064 = vmatprep.subr.mxu0 0.0
    %2065 = vmatpush1.msra.mxu0 0.0
    %2066 = vmatprep.subr.mxu0 0.0
    %2067 = vmatpush1.msra.mxu0 0.0
    %2068 = vmatprep.subr.mxu0 0.0
    %2069 = vmatpush1.msra.mxu0 0.0
    %2070 = vmatprep.subr.mxu0 0.0
    %2071 = vmatpush1.msra.mxu0 0.0
    %2072 = vmatprep.subr.mxu0 0.0
    %2073 = vmatpush1.msra.mxu0 0.0
    %2074 = vmatprep.subr.mxu0 0.0
    %2075 = vmatpush1.msra.mxu0 0.0
    %2076 = vmatprep.subr.mxu0 0.0
    %2077 = vmatpush1.msra.mxu0 0.0
    %2078 = vmatprep.subr.mxu0 0.0
    %2079 = vmatpush1.msra.mxu0 0.0
    %2080 = vmatprep.subr.mxu0 0.0
    %2081 = vmatpush1.msra.mxu0 0.0
    %2082 = vmatprep.subr.mxu0 0.0
    %2083 = vmatpush1.msra.mxu0 0.0
    %2084 = vmatprep.subr.mxu0 0.0
    %2085 = vmatpush1.msra.mxu0 0.0
    %2086 = vmatprep.subr.mxu0 0.0
    %2087 = vmatpush1.msra.mxu0 0.0
    %2088 = vmatprep.subr.mxu0 0.0
    %2089 = vmatpush1.msra.mxu0 0.0
    %2090 = vmatprep.subr.mxu0 0.0
    %2091 = vmatpush1.msra.mxu0 0.0
    %2092 = vmatprep.subr.mxu0 0.0
    %2093 = vmatpush1.msra.mxu0 0.0
    %2094 = vmatprep.subr.mxu0 0.0
    %2095 = vmatpush1.msra.mxu0 0.0
    %2096 = vmatprep.subr.mxu0 0.0
    %2097 = vmatpush1.msra.mxu0 0.0
    %2098 = vmatprep.subr.mxu0 0.0
    %2099 = vmatpush1.msra.mxu0 0.0
    %2100 = vmatprep.subr.mxu0 0.0
    %2101 = vmatpush1.msra.mxu0 0.0
    %2102 = vmatprep.subr.mxu0 0.0
    %2103 = vmatpush1.msra.mxu0 0.0
    %2104 = vmatprep.subr.mxu0 0.0
    %2105 = vmatpush1.msra.mxu0 0.0
    %2106 = vmatprep.mubr.f32.mxu0 0.0
    %2107 = vmatmul.mubr.f32.gmra.mrb[0].mxu0 %v2040
    %v2108 = vpop.f32.mrb[0].mxu0
    %v2109 = vadd.f32 %v2037, %v2108
    %v2110 = vpop.f32.mrb[0].mxu0
    %2111 = vdwg.mxu0
    %2112 = vst [vmem:[#allocation7] sm:$0xff] %v2109
    // Predicated region
    $region54: #{tpu_custom_call.1} parent=1 // pred_check
      _
    $region55: #{tpu_custom_call.1} parent=1 // pred_check_branch
      %2114 = sbr.rel (0) target = $region57
    $region56: #{tpu_custom_call.1} parent=1 // pred_region
      %s2116 = ssub.s32 128, 128
      %2117 = vsyncadd [#allocation4], %s2116
      %s2119 = sshll.u32 [#allocation7], 4
      %s2120 = int_to_ptr.vmem [resolvable:$true] %s2119
      %2122 = dma.vmem_to_hbm [thread:$0]  %s2120, 128, %s11, [#allocation4]
    $region57: #{tpu_custom_call.1} parent=1 // pred_fallthru
      _
    // Predicated region
    $region58: #{tpu_custom_call.1} parent=1 // pred_check
      _
    $region59: #{tpu_custom_call.1} parent=1 // pred_check_branch
      %2124 = sbr.rel (0) target = $region61
    $region60: #{tpu_custom_call.1} parent=1 // pred_region
      %2125 = dma.done [#allocation4], 128
    $region61: #{tpu_custom_call.1} parent=1 // pred_fallthru
      _
    %2126 = vsyncpa [#allocation3], 1
    %2127 = vsyncpa [#allocation6], 1
    %2128 = vsyncpa [#allocation4], 1

</llo_original>
